<compile_context>
chip_gen: v7x
topology: tpu7x:2x2x1
jax: 0.10.0
libtpu: 0.0.40
codegen_flags: <defaults>
</compile_context>

<pallas_src>
import functools
import math

import jax
import jax.numpy as jnp
from jax import lax
from jax.experimental import pallas as pl
from jax.experimental.pallas import tpu as pltpu


def _round_up(x, m):
    return ((x + m - 1) // m) * m


# ---------------------------------------------------------------------------------
# shared TDE classifier head (runs on f32 pooled features, bf16/f32 MXU operands)
# ---------------------------------------------------------------------------------
def _tde_heads(global_feat, feats_max, memory_ref, w_ctx_ref, b_ctx_ref,
               w_sel_ref, b_sel_ref, w_log_ref, b_log_ref, out_ref, exact_recip):
    mm_dtype = w_ctx_ref.dtype                       # bf16 (or f32) matmul operands

    # context classifier + softmax over classes (exp/sum kept in f32; padded classes
    # carry a -1e30 bias so they vanish under exp)
    ctx = jnp.dot(global_feat.astype(mm_dtype), w_ctx_ref[...],
                  preferred_element_type=jnp.float32) + b_ctx_ref[...]
    ctx_m = jnp.max(ctx, axis=1, keepdims=True)
    ctx_e = jnp.exp(ctx - ctx_m)
    den = jnp.sum(ctx_e, axis=1, keepdims=True)
    if exact_recip:                                  # f32 path: tight accuracy
        pre_logits = ctx_e / den
    else:                                            # bf16 path: EUP approx reciprocal
        pre_logits = ctx_e * pl.reciprocal(den, approx=True)

    # counterfactual memory feature
    memory_feature = jnp.dot(pre_logits.astype(mm_dtype), memory_ref[...],
                             preferred_element_type=jnp.float32)     # (B_T, C_pad)

    # selector fuse (tanh and the subtraction stay in f32)
    selector = jnp.tanh(
        jnp.dot(feats_max.astype(mm_dtype), w_sel_ref[...],
                preferred_element_type=jnp.float32) + b_sel_ref[...])
    combine = feats_max - selector * memory_feature  # f32 (B_T, C_pad)

    # logit classifier -> lane-dense (B_T, NC_pad) store
    out_ref[...] = jnp.dot(combine.astype(mm_dtype), w_log_ref[...],
                           preferred_element_type=jnp.float32) + b_log_ref[...]


# ---------------------------------------------------------------------------------
# kernels
# ---------------------------------------------------------------------------------
def tde_kernel_multi(feats_ref, memory_ref, w_ctx_ref, b_ctx_ref,
                     w_sel_ref, b_sel_ref, w_log_ref, b_log_ref,
                     out_ref, sum_acc, max_acc,
                     *, hw_actual, hw_tile, inv_hw, needs_hw_mask, exact_recip):
    """Grid = (B tiles [parallel], HW tiles [arbitrary/reduction])."""
    j = pl.program_id(1)
    last = pl.num_programs(1) - 1

    @pl.when(j == 0)
    def _init():
        sum_acc[...] = jnp.zeros_like(sum_acc)
        max_acc[...] = jnp.full_like(max_acc, -jnp.inf)

    x = feats_ref[...].astype(jnp.float32)           # bf16 stream -> f32 accumulation

    def _accumulate(x_sum, x_max):
        sum_acc[...] += jnp.sum(x_sum, axis=1)                       # (B_T, C_pad)
        max_acc[...] = jnp.maximum(max_acc[...], jnp.max(x_max, axis=1))

    if needs_hw_mask:
        # Zero-padded spatial rows only exist in the FINAL HW tile: every other tile
        # takes the unmasked fast path; iota/compare/select are paid exactly once per
        # B tile (and the iota carries no B dimension).
        @pl.when(j != last)
        def _fast():
            _accumulate(x, x)

        @pl.when(j == last)
        def _masked():
            pos = lax.broadcasted_iota(jnp.int32, (1,) + x.shape[1:], 1)
            valid = pos < (hw_actual - j * hw_tile)
            # note: padded batch rows still see >=1 valid (zero) position, so
            # max_acc never stays -inf and the finalize stays NaN-free.
            _accumulate(jnp.where(valid, x, 0.0), jnp.where(valid, x, -jnp.inf))
    else:
        _accumulate(x, x)

    # heads run once per B tile, after the spatial reduction
    @pl.when(j == last)
    def _finalize():
        _tde_heads(sum_acc[...] * inv_hw, max_acc[...],
                   memory_ref, w_ctx_ref, b_ctx_ref, w_sel_ref, b_sel_ref,
                   w_log_ref, b_log_ref, out_ref, exact_recip)


def tde_kernel_single(feats_ref, memory_ref, w_ctx_ref, b_ctx_ref,
                      w_sel_ref, b_sel_ref, w_log_ref, b_log_ref, out_ref,
                      *, hw_actual, inv_hw, needs_hw_mask, exact_recip):
    """Grid = (B tiles,). Whole spatial extent fits one tile: no scratch, no
    cross-step accumulation, mask (if any) applied exactly once."""
    x = feats_ref[...].astype(jnp.float32)           # (B_T, HW_pad, C_pad)
    if needs_hw_mask:
        pos = lax.broadcasted_iota(jnp.int32, (1,) + x.shape[1:], 1)
        valid = pos < hw_actual
        x_sum = jnp.where(valid, x, 0.0)
        x_max = jnp.where(valid, x, -jnp.inf)
    else:
        x_sum, x_max = x, x
    _tde_heads(jnp.sum(x_sum, axis=1) * inv_hw, jnp.max(x_max, axis=1),
               memory_ref, w_ctx_ref, b_ctx_ref, w_sel_ref, b_sel_ref,
               w_log_ref, b_log_ref, out_ref, exact_recip)


def tde_kernel_heads(feats_ref, memory_ref, w_ctx_ref, b_ctx_ref,
                     w_sel_ref, b_sel_ref, w_log_ref, b_log_ref, out_ref,
                     *, exact_recip):
    """Grid = (B tiles,). 2-D pooled-feature input: mean == max == x, heads only."""
    x = feats_ref[...].astype(jnp.float32)
    _tde_heads(x, x, memory_ref, w_ctx_ref, b_ctx_ref, w_sel_ref, b_sel_ref,
               w_log_ref, b_log_ref, out_ref, exact_recip)


# ---------------------------------------------------------------------------------
# wrapper helpers
# ---------------------------------------------------------------------------------
_BUFFERED = getattr(pl, "Buffered", None)
_PIPELINE_MODE_OK = [_BUFFERED is not None]   # disabled after the first failure


def _vmem_budget_bytes():
    """Per-generation VMEM budget used for tile sizing AND vmem_limit_bytes:
    v4/v5e/v5p/v6e have 128 MiB VMEM per TensorCore -> spend up to 64 MiB;
    v7x has only 64 MiB per TensorCore (and unknown chips) -> conservative 40 MiB."""
    try:
        kind = jax.devices()[0].device_kind.lower()
    except Exception:
        kind = ""
    if any(t in kind for t in ("v4", "v5", "v6")):
        return 64 * 1024 * 1024
    return 40 * 1024 * 1024


def _pick_b_tile(B):
    bt = min(128, _round_up(B, 8))
    # Guarantee >=2 B tiles when B is big enough so the 'parallel' B axis can shard
    # across TensorCores (v7x / 2-TC chips); harmless on single-TC v5e/v6e since the
    # reduction phase is memory-bound.  (B_TILE=256 on v6e when B>=256 could further
    # fill the 2x256 MXU in the finalize phase; kept at <=128 for portability.)
    if B >= 16 and _round_up(B, bt) // bt == 1:
        bt = _round_up(_round_up(B, 8) // 2, 8)
    return bt


def _prep_weights(params, C_pad, NC_pad, mm_dtype):
    def pad2(a, r, c, val=0.0):
        return jnp.pad(a, ((0, r - a.shape[0]), (0, c - a.shape[1])),
                       constant_values=val)
    memory = pad2(params["memory"], NC_pad, C_pad).astype(mm_dtype)
    w_ctx = pad2(params["w_ctx"], C_pad, NC_pad).astype(mm_dtype)
    # -1e30 bias on padded classes -> exp underflows to 0 -> softmax ignores them
    b_ctx = pad2(params["b_ctx"], 1, NC_pad, val=-1e30).astype(jnp.float32)
    w_sel = pad2(params["w_sel"], C_pad, C_pad).astype(mm_dtype)
    b_sel = pad2(params["b_sel"], 1, C_pad).astype(jnp.float32)
    w_log = pad2(params["w_log"], C_pad, NC_pad).astype(mm_dtype)
    b_log = pad2(params["b_log"], 1, NC_pad).astype(jnp.float32)
    return (memory, w_ctx, b_ctx, w_sel, b_sel, w_log, b_log)


def _weights_bytes(weights):
    return sum(int(w.size) * w.dtype.itemsize for w in weights)


def _call_pallas(kernel, grid, feats_spec, out_spec, out_shape, scratch_shapes,
                 dim_semantics, vmem_limit, cost_estimate, feats, weights):
    """Build and run the pallas_call.  Weights/biases never change block index, so
    they request single buffering (pl.Buffered(1)) to halve their VMEM footprint
    (matters most on v7x's 64 MiB VMEM); falls back to default double-buffering if
    the installed JAX rejects pipeline_mode."""

    def const_spec(shape, mode):
        idx = lambda *_: (0,) * len(shape)
        if mode is None:
            return pl.BlockSpec(shape, idx)
        return pl.BlockSpec(shape, idx, pipeline_mode=mode)

    def run(single_buffer):
        mode = _BUFFERED(1) if single_buffer else None
        w_specs = [const_spec(w.shape, mode) for w in weights]
        return pl.pallas_call(
            kernel,
            out_shape=out_shape,
            grid_spec=pltpu.PrefetchScalarGridSpec(
                num_scalar_prefetch=0,
                grid=grid,
                in_specs=[feats_spec] + w_specs,
                out_specs=out_spec,
                scratch_shapes=scratch_shapes),
            compiler_params=pltpu.CompilerParams(
                dimension_semantics=dim_semantics,
                vmem_limit_bytes=vmem_limit),
            cost_estimate=cost_estimate,
        )(feats, *weights)

    if _PIPELINE_MODE_OK[0]:
        try:
            return run(True)
        except Exception:
            _PIPELINE_MODE_OK[0] = False   # unsupported -> default double-buffering
    return run(False)


# ---------------------------------------------------------------------------------
# public forward
# ---------------------------------------------------------------------------------
def tde_classifier_forward(feats, params, *, use_bf16=True, max_hw_tile=None):
    """feats: (B, C) pooled or (B, C, H, W) NCHW float. Returns logits (B, NC) f32."""
    mm_dtype = jnp.bfloat16 if use_bf16 else jnp.float32
    elem = jnp.dtype(mm_dtype).itemsize
    NC = params["memory"].shape[0]
    NC_pad = _round_up(NC, 128)
    budget = _vmem_budget_bytes()

    # ---- 2-D pooled-feature input: heads-only kernel (mean == max == x) ----------
    if feats.ndim == 2:
        B, C = feats.shape
        C_pad = _round_up(C, 128)
        B_TILE = _pick_b_tile(B)
        B_pad = _round_up(B, B_TILE)
        x = jnp.pad(feats.astype(mm_dtype), ((0, B_pad - B), (0, C_pad - C)))
        weights = _prep_weights(params, C_pad, NC_pad, mm_dtype)
        cost = pl.CostEstimate(
            flops=int(2 * B_pad * (3 * C_pad * NC_pad + C_pad * C_pad)),
            transcendentals=int(B_pad * (NC_pad + C_pad)),
            bytes_accessed=int(x.size * elem + _weights_bytes(weights)
                               + B_pad * NC_pad * 4))
        out = _call_pallas(
            kernel=functools.partial(tde_kernel_heads, exact_recip=not use_bf16),
            grid=(B_pad // B_TILE,),
            feats_spec=pl.BlockSpec((B_TILE, C_pad), lambda i: (i, 0)),
            out_spec=pl.BlockSpec((B_TILE, NC_pad), lambda i: (i, 0)),
            out_shape=jax.ShapeDtypeStruct((B_pad, NC_pad), jnp.float32),
            scratch_shapes=[],
            dim_semantics=("parallel",),
            vmem_limit=budget, cost_estimate=cost, feats=x, weights=weights)
        return out[:B, :NC]

    # ---- (B, C, H, W): fuse the bf16 cast with the NCHW -> (B, HW, C) transpose ---
    B, C = feats.shape[:2]
    f = feats.astype(mm_dtype).reshape(B, C, -1)   # cast first: halves transpose bytes
    HW = f.shape[2]
    f = f.transpose(0, 2, 1)                       # (B, HW, C): channels lane-dense

    C_pad = _round_up(C, 128)
    B_TILE = _pick_b_tile(B)
    B_pad = _round_up(B, B_TILE)

    # ---- VMEM-budgeted HW tile (conservative: double-buffered weights, f32 temps) -
    fixed = (2 * elem * (3 * C_pad * NC_pad + C_pad * C_pad)   # 4 weight mats x2 bufs
             + 2 * B_TILE * NC_pad * 4                         # output tile x2 bufs
             + 2 * B_TILE * C_pad * 4                          # sum/max accumulators
             + 8 * B_TILE * max(C_pad, NC_pad) * 4             # finalize f32 temps
             + 4 * 1024 * 1024)                                # biases + margin
    per_row = B_TILE * C_pad * (2 * elem + 4)     # feats row: 2 DMA buffers + f32 temp
    hw_fit = max(8, ((budget - fixed) // per_row) // 8 * 8)
    HW_TILE = int(min(hw_fit, 256, _round_up(HW, 8)))
    if max_hw_tile is not None:                    # test hook to force multi-tile path
        HW_TILE = min(HW_TILE, _round_up(max_hw_tile, 8))

    weights = _prep_weights(params, C_pad, NC_pad, mm_dtype)

    if HW_TILE >= _round_up(HW, 8):
        # whole spatial extent in one tile -> collapse the HW grid axis entirely
        HW_pad = HW_TILE = _round_up(HW, 8)
        grid = (B_pad // B_TILE,)
        kernel = functools.partial(tde_kernel_single, hw_actual=HW, inv_hw=1.0 / HW,
                                   needs_hw_mask=(HW_pad != HW),
                                   exact_recip=not use_bf16)
        feats_spec = pl.BlockSpec((B_TILE, HW_TILE, C_pad), lambda i: (i, 0, 0))
        out_spec = pl.BlockSpec((B_TILE, NC_pad), lambda i: (i, 0))
        scratch = []
        dims = ("parallel",)
    else:
        HW_pad = _round_up(HW, HW_TILE)
        grid = (B_pad // B_TILE, HW_pad // HW_TILE)
        kernel = functools.partial(tde_kernel_multi, hw_actual=HW, hw_tile=HW_TILE,
                                   inv_hw=1.0 / HW, needs_hw_mask=(HW_pad != HW),
                                   exact_recip=not use_bf16)
        feats_spec = pl.BlockSpec((B_TILE, HW_TILE, C_pad), lambda i, j: (i, j, 0))
        out_spec = pl.BlockSpec((B_TILE, NC_pad), lambda i, j: (i, 0))
        scratch = [pltpu.VMEM((B_TILE, C_pad), jnp.float32),    # running spatial sum
                   pltpu.VMEM((B_TILE, C_pad), jnp.float32)]    # running spatial max
        dims = ("parallel", "arbitrary")

    f = jnp.pad(f, ((0, B_pad - B), (0, HW_pad - HW), (0, C_pad - C)))
    cost = pl.CostEstimate(
        flops=int(2 * B_pad * (3 * C_pad * NC_pad + C_pad * C_pad)
                  + 2 * B_pad * HW_pad * C_pad),
        transcendentals=int(B_pad * (NC_pad + C_pad)),
        bytes_accessed=int(f.size * elem + _weights_bytes(weights)
                           + B_pad * NC_pad * 4))

    out = _call_pallas(kernel=kernel, grid=grid, feats_spec=feats_spec,
                       out_spec=out_spec,
                       out_shape=jax.ShapeDtypeStruct((B_pad, NC_pad), jnp.float32),
                       scratch_shapes=scratch, dim_semantics=dims,
                       vmem_limit=budget, cost_estimate=cost,
                       feats=f, weights=weights)
    return out[:B, :NC]


# ---------------------------------------------------------------------------------
# params / reference
# ---------------------------------------------------------------------------------
def init_params(key, num_classes, feat_dim):
    """Deterministic parameter init (nn.Linear-style uniform; memory buffer filled
    with small deterministic values instead of zeros so the matmul path is exercised)."""
    ks = jax.random.split(key, 7)

    def linear(kw, kb, fan_in, fan_out):
        bound = 1.0 / math.sqrt(fan_in)
        w = jax.random.uniform(kw, (fan_in, fan_out), jnp.float32, -bound, bound)
        b = jax.random.uniform(kb, (1, fan_out), jnp.float32, -bound, bound)
        return w, b

    w_ctx, b_ctx = linear(ks[0], ks[1], feat_dim, num_classes)   # context_clf
    w_sel, b_sel = linear(ks[2], ks[3], feat_dim, feat_dim)      # selector
    w_log, b_log = linear(ks[4], ks[5], feat_dim, num_classes)   # logit_clf
    memory = 0.1 * jax.random.normal(ks[6], (num_classes, feat_dim), jnp.float32)
    return dict(memory=memory,
                w_ctx=w_ctx, b_ctx=b_ctx,
                w_sel=w_sel, b_sel=b_sel,
                w_log=w_log, b_log=b_log)


def reference_forward(feats, p):
    """Pure-JAX f32 reference mirroring the PyTorch forward (stagetwo, selector fuse)."""
    if feats.ndim == 2:
        global_feat = feats
        feats_max = feats
    else:
        B, C = feats.shape[:2]
        f = feats.reshape(B, C, -1)
        global_feat = f.mean(axis=-1)
        feats_max = f.max(axis=-1)
    pre = jax.nn.softmax(global_feat @ p["w_ctx"] + p["b_ctx"], axis=1)
    mem_feat = pre @ p["memory"]
    sel = jnp.tanh(feats_max @ p["w_sel"] + p["b_sel"])
    combine = feats_max - sel * mem_feat
    return combine @ p["w_log"] + p["b_log"]


if __name__ == "__main__":
    B, C, H, W = 2, 32, 8, 8       # feat_dim = 32, HW = 64
    NUM_CLASSES = 16

    key = jax.random.PRNGKey(0)
    k_x, k_p = jax.random.split(key)
    x = jax.random.normal(k_x, (B, C, H, W), jnp.float32)   # NCHW input
    params = init_params(k_p, NUM_CLASSES, C)

    ref = reference_forward(x, params)

    # default path: bf16 feats stream + bf16 MXU operands, f32 accumulation
    # (HW=64 collapses to the single-HW-tile kernel, no scratch)
    logits = jax.block_until_ready(tde_classifier_forward(x, params))
    assert logits.shape == (B, NUM_CLASSES)
    assert jnp.allclose(logits, ref, atol=3e-2, rtol=3e-2), "bf16 path mismatch"

    # f32 path (exact softmax reciprocal), tight tolerance
    logits_f32 = jax.block_until_ready(tde_classifier_forward(x, params, use_bf16=False))
    assert jnp.allclose(logits_f32, ref, atol=1e-3, rtol=1e-3), "f32 path mismatch"

    # force the multi-HW-tile grid reduction with a masked final tile (64 -> 3x24)
    logits_mt = jax.block_until_ready(
        tde_classifier_forward(x, params, use_bf16=False, max_hw_tile=24))
    assert jnp.allclose(logits_mt, ref, atol=1e-3, rtol=1e-3), "multi-tile mismatch"

    # single-tile path with spatial padding mask (HW = 49 -> padded to 56)
    x3 = jax.random.normal(k_x, (B, C, 7, 7), jnp.float32)
    logits_m = jax.block_until_ready(
        tde_classifier_forward(x3, params, use_bf16=False))
    assert jnp.allclose(logits_m, reference_forward(x3, params),
                        atol=1e-3, rtol=1e-3), "masked single-tile mismatch"

    # 2-D pooled-features input -> heads-only kernel (no spatial reduction at all)
    x2 = jax.random.normal(k_x, (B, C), jnp.float32)
    logits2 = jax.block_until_ready(
        tde_classifier_forward(x2, params, use_bf16=False))
    assert jnp.allclose(logits2, reference_forward(x2, params),
                        atol=1e-3, rtol=1e-3), "2-D branch mismatch"

    print("KERNEL_OK")
</pallas_src>

<mosaic_0001>
module attributes {stable_mosaic.version = 11 : i64} {
  func.func @tde_kernel_single(%arg0: i32, %arg1: memref<8x64x128xbf16, #tpu.memory_space<vmem>>, %arg2: memref<128x128xbf16, #tpu.memory_space<vmem>>, %arg3: memref<128x128xbf16, #tpu.memory_space<vmem>>, %arg4: memref<1x128xf32, #tpu.memory_space<vmem>>, %arg5: memref<128x128xbf16, #tpu.memory_space<vmem>>, %arg6: memref<1x128xf32, #tpu.memory_space<vmem>>, %arg7: memref<128x128xbf16, #tpu.memory_space<vmem>>, %arg8: memref<1x128xf32, #tpu.memory_space<vmem>>, %arg9: memref<8x128xf32, #tpu.memory_space<vmem>>) attributes {dimension_semantics = [#tpu.dimension_semantics<parallel>], iteration_bounds = array<i64: 1>, scalar_prefetch = 0 : i64, scratch_operands = 0 : i64, tpu.core_type = #tpu.core_type<tc>, window_params = [{transform_indices = @transform_0, window_bounds = array<i64: 8, 64, 128>}, {pipeline_mode = #tpu.pipeline_mode<synchronous>, transform_indices = @transform_1, window_bounds = array<i64: 128, 128>}, {pipeline_mode = #tpu.pipeline_mode<synchronous>, transform_indices = @transform_2, window_bounds = array<i64: 128, 128>}, {pipeline_mode = #tpu.pipeline_mode<synchronous>, transform_indices = @transform_3, window_bounds = array<i64: 1, 128>}, {pipeline_mode = #tpu.pipeline_mode<synchronous>, transform_indices = @transform_4, window_bounds = array<i64: 128, 128>}, {pipeline_mode = #tpu.pipeline_mode<synchronous>, transform_indices = @transform_5, window_bounds = array<i64: 1, 128>}, {pipeline_mode = #tpu.pipeline_mode<synchronous>, transform_indices = @transform_6, window_bounds = array<i64: 128, 128>}, {pipeline_mode = #tpu.pipeline_mode<synchronous>, transform_indices = @transform_7, window_bounds = array<i64: 1, 128>}, {transform_indices = @transform_8, window_bounds = array<i64: 8, 128>}]} {
    %c0 = arith.constant 0 : index
    %c0_0 = arith.constant 0 : index
    %c0_1 = arith.constant 0 : index
    %0 = vector.load %arg1[%c0, %c0_0, %c0_1] : memref<8x64x128xbf16, #tpu.memory_space<vmem>>, vector<8x64x128xbf16>
    %1 = arith.extf %0 : vector<8x64x128xbf16> to vector<8x64x128xf32>
    %cst = arith.constant dense<0.000000e+00> : vector<8x128xf32>
    %2 = vector.multi_reduction <add>, %1, %cst [1] : vector<8x64x128xf32> to vector<8x128xf32>
    %cst_2 = arith.constant 1.562500e-02 : f32
    %3 = vector.broadcast %cst_2 : f32 to vector<8x128xf32>
    %4 = arith.mulf %2, %3 : vector<8x128xf32>
    %cst_3 = arith.constant dense<0xFF800000> : vector<8x128xf32>
    %5 = vector.multi_reduction <maximumf>, %1, %cst_3 [1] : vector<8x64x128xf32> to vector<8x128xf32>
    %6 = arith.truncf %4 : vector<8x128xf32> to vector<8x128xbf16>
    %c0_4 = arith.constant 0 : index
    %c0_5 = arith.constant 0 : index
    %7 = vector.load %arg3[%c0_4, %c0_5] : memref<128x128xbf16, #tpu.memory_space<vmem>>, vector<128x128xbf16>
    %cst_6 = arith.constant dense<0.000000e+00> : vector<8x128xf32>
    %8 = tpu.matmul %6, %7, %cst_6 {dimension_numbers = #tpu.dot_dimension_numbers<[1], [0], [0], [1], [0, 0, 1, 1], [], []>} : vector<8x128xbf16>, vector<128x128xbf16>, vector<8x128xf32> -> vector<8x128xf32>
    %c0_7 = arith.constant 0 : index
    %c0_8 = arith.constant 0 : index
    %9 = vector.load %arg4[%c0_7, %c0_8] : memref<1x128xf32, #tpu.memory_space<vmem>>, vector<1x128xf32>
    %10 = vector.broadcast %9 : vector<1x128xf32> to vector<8x128xf32>
    %11 = arith.addf %8, %10 : vector<8x128xf32>
    %cst_9 = arith.constant dense<0xFF800000> : vector<8xf32>
    %12 = vector.multi_reduction <maximumf>, %11, %cst_9 [1] : vector<8x128xf32> to vector<8xf32>
    %13 = vector.shape_cast %12 : vector<8xf32> to vector<8x1xf32>
    %14 = vector.broadcast %13 : vector<8x1xf32> to vector<8x128xf32>
    %15 = arith.subf %11, %14 : vector<8x128xf32>
    %16 = math.exp %15 : vector<8x128xf32>
    %cst_10 = arith.constant dense<0.000000e+00> : vector<8xf32>
    %17 = vector.multi_reduction <add>, %16, %cst_10 [1] : vector<8x128xf32> to vector<8xf32>
    %18 = vector.shape_cast %17 : vector<8xf32> to vector<8x1xf32>
    %19 = tpu.reciprocal %18 {approx = true} : vector<8x1xf32> -> vector<8x1xf32>
    %20 = vector.broadcast %19 : vector<8x1xf32> to vector<8x128xf32>
    %21 = arith.mulf %16, %20 : vector<8x128xf32>
    %22 = arith.truncf %21 : vector<8x128xf32> to vector<8x128xbf16>
    %c0_11 = arith.constant 0 : index
    %c0_12 = arith.constant 0 : index
    %23 = vector.load %arg2[%c0_11, %c0_12] : memref<128x128xbf16, #tpu.memory_space<vmem>>, vector<128x128xbf16>
    %cst_13 = arith.constant dense<0.000000e+00> : vector<8x128xf32>
    %24 = tpu.matmul %22, %23, %cst_13 {dimension_numbers = #tpu.dot_dimension_numbers<[1], [0], [0], [1], [0, 0, 1, 1], [], []>} : vector<8x128xbf16>, vector<128x128xbf16>, vector<8x128xf32> -> vector<8x128xf32>
    %25 = arith.truncf %5 : vector<8x128xf32> to vector<8x128xbf16>
    %c0_14 = arith.constant 0 : index
    %c0_15 = arith.constant 0 : index
    %26 = vector.load %arg5[%c0_14, %c0_15] : memref<128x128xbf16, #tpu.memory_space<vmem>>, vector<128x128xbf16>
    %cst_16 = arith.constant dense<0.000000e+00> : vector<8x128xf32>
    %27 = tpu.matmul %25, %26, %cst_16 {dimension_numbers = #tpu.dot_dimension_numbers<[1], [0], [0], [1], [0, 0, 1, 1], [], []>} : vector<8x128xbf16>, vector<128x128xbf16>, vector<8x128xf32> -> vector<8x128xf32>
    %c0_17 = arith.constant 0 : index
    %c0_18 = arith.constant 0 : index
    %28 = vector.load %arg6[%c0_17, %c0_18] : memref<1x128xf32, #tpu.memory_space<vmem>>, vector<1x128xf32>
    %29 = vector.broadcast %28 : vector<1x128xf32> to vector<8x128xf32>
    %30 = arith.addf %27, %29 : vector<8x128xf32>
    %31 = math.tanh %30 : vector<8x128xf32>
    %32 = arith.mulf %31, %24 : vector<8x128xf32>
    %33 = arith.subf %5, %32 : vector<8x128xf32>
    %34 = arith.truncf %33 : vector<8x128xf32> to vector<8x128xbf16>
    %c0_19 = arith.constant 0 : index
    %c0_20 = arith.constant 0 : index
    %35 = vector.load %arg7[%c0_19, %c0_20] : memref<128x128xbf16, #tpu.memory_space<vmem>>, vector<128x128xbf16>
    %cst_21 = arith.constant dense<0.000000e+00> : vector<8x128xf32>
    %36 = tpu.matmul %34, %35, %cst_21 {dimension_numbers = #tpu.dot_dimension_numbers<[1], [0], [0], [1], [0, 0, 1, 1], [], []>} : vector<8x128xbf16>, vector<128x128xbf16>, vector<8x128xf32> -> vector<8x128xf32>
    %c0_22 = arith.constant 0 : index
    %c0_23 = arith.constant 0 : index
    %37 = vector.load %arg8[%c0_22, %c0_23] : memref<1x128xf32, #tpu.memory_space<vmem>>, vector<1x128xf32>
    %38 = vector.broadcast %37 : vector<1x128xf32> to vector<8x128xf32>
    %39 = arith.addf %36, %38 : vector<8x128xf32>
    %c0_24 = arith.constant 0 : index
    %c0_25 = arith.constant 0 : index
    %40 = vector.load %arg9[%c0_24, %c0_25] : memref<8x128xf32, #tpu.memory_space<vmem>>, vector<8x128xf32>
    tpu.vector_store %arg9[%c0_24, %c0_25], %39 {strides = array<i32>} : memref<8x128xf32, #tpu.memory_space<vmem>>, vector<8x128xf32>,
    return
  }
  func.func @transform_0(%arg0: i32) -> (i32, i32, i32) {
    %c0_i32 = arith.constant 0 : i32
    %c0_i32_0 = arith.constant 0 : i32
    %c0_i32_1 = arith.constant 0 : i32
    return %arg0, %c0_i32, %c0_i32_0 : i32, i32, i32
  }
  func.func @transform_1(%arg0: i32) -> (i32, i32) {
    %c0_i32 = arith.constant 0 : i32
    %c0_i32_0 = arith.constant 0 : i32
    %c0_i32_1 = arith.constant 0 : i32
    return %c0_i32, %c0_i32_0 : i32, i32
  }
  func.func @transform_2(%arg0: i32) -> (i32, i32) {
    %c0_i32 = arith.constant 0 : i32
    %c0_i32_0 = arith.constant 0 : i32
    %c0_i32_1 = arith.constant 0 : i32
    return %c0_i32, %c0_i32_0 : i32, i32
  }
  func.func @transform_3(%arg0: i32) -> (i32, i32) {
    %c0_i32 = arith.constant 0 : i32
    %c0_i32_0 = arith.constant 0 : i32
    %c0_i32_1 = arith.constant 0 : i32
    return %c0_i32, %c0_i32_0 : i32, i32
  }
  func.func @transform_4(%arg0: i32) -> (i32, i32) {
    %c0_i32 = arith.constant 0 : i32
    %c0_i32_0 = arith.constant 0 : i32
    %c0_i32_1 = arith.constant 0 : i32
    return %c0_i32, %c0_i32_0 : i32, i32
  }
  func.func @transform_5(%arg0: i32) -> (i32, i32) {
    %c0_i32 = arith.constant 0 : i32
    %c0_i32_0 = arith.constant 0 : i32
    %c0_i32_1 = arith.constant 0 : i32
    return %c0_i32, %c0_i32_0 : i32, i32
  }
  func.func @transform_6(%arg0: i32) -> (i32, i32) {
    %c0_i32 = arith.constant 0 : i32
    %c0_i32_0 = arith.constant 0 : i32
    %c0_i32_1 = arith.constant 0 : i32
    return %c0_i32, %c0_i32_0 : i32, i32
  }
  func.func @transform_7(%arg0: i32) -> (i32, i32) {
    %c0_i32 = arith.constant 0 : i32
    %c0_i32_0 = arith.constant 0 : i32
    %c0_i32_1 = arith.constant 0 : i32
    return %c0_i32, %c0_i32_0 : i32, i32
  }
  func.func @transform_8(%arg0: i32) -> (i32, i32) {
    %c0_i32 = arith.constant 0 : i32
    %c0_i32_0 = arith.constant 0 : i32
    return %arg0, %c0_i32 : i32, i32
  }
}

module attributes {stable_mosaic.version = 11 : i64} {
  func.func @tde_kernel_single(%arg0: i32, %arg1: memref<8x64x128xbf16, #tpu.memory_space<vmem>>, %arg2: memref<128x128xbf16, #tpu.memory_space<vmem>>, %arg3: memref<128x128xbf16, #tpu.memory_space<vmem>>, %arg4: memref<1x128xf32, #tpu.memory_space<vmem>>, %arg5: memref<128x128xbf16, #tpu.memory_space<vmem>>, %arg6: memref<1x128xf32, #tpu.memory_space<vmem>>, %arg7: memref<128x128xbf16, #tpu.memory_space<vmem>>, %arg8: memref<1x128xf32, #tpu.memory_space<vmem>>, %arg9: memref<8x128xf32, #tpu.memory_space<vmem>>) attributes {dimension_semantics = [#tpu.dimension_semantics<parallel>], iteration_bounds = array<i64: 1>, scalar_prefetch = 0 : i64, scratch_operands = 0 : i64, tpu.core_type = #tpu.core_type<tc>, window_params = [{transform_indices = @transform_0, window_bounds = array<i64: 8, 64, 128>}, {pipeline_mode = #tpu.pipeline_mode<synchronous>, transform_indices = @transform_1, window_bounds = array<i64: 128, 128>}, {pipeline_mode = #tpu.pipeline_mode<synchronous>, transform_indices = @transform_2, window_bounds = array<i64: 128, 128>}, {pipeline_mode = #tpu.pipeline_mode<synchronous>, transform_indices = @transform_3, window_bounds = array<i64: 1, 128>}, {pipeline_mode = #tpu.pipeline_mode<synchronous>, transform_indices = @transform_4, window_bounds = array<i64: 128, 128>}, {pipeline_mode = #tpu.pipeline_mode<synchronous>, transform_indices = @transform_5, window_bounds = array<i64: 1, 128>}, {pipeline_mode = #tpu.pipeline_mode<synchronous>, transform_indices = @transform_6, window_bounds = array<i64: 128, 128>}, {pipeline_mode = #tpu.pipeline_mode<synchronous>, transform_indices = @transform_7, window_bounds = array<i64: 1, 128>}, {transform_indices = @transform_8, window_bounds = array<i64: 8, 128>}]} {
    %c0 = arith.constant 0 : index
    %c0_0 = arith.constant 0 : index
    %c0_1 = arith.constant 0 : index
    %0 = vector.load %arg1[%c0, %c0_0, %c0_1] : memref<8x64x128xbf16, #tpu.memory_space<vmem>>, vector<8x64x128xbf16>
    %1 = arith.extf %0 : vector<8x64x128xbf16> to vector<8x64x128xf32>
    %cst = arith.constant dense<0.000000e+00> : vector<8x128xf32>
    %2 = vector.multi_reduction <add>, %1, %cst [1] : vector<8x64x128xf32> to vector<8x128xf32>
    %cst_2 = arith.constant 1.562500e-02 : f32
    %3 = vector.broadcast %cst_2 : f32 to vector<8x128xf32>
    %4 = arith.mulf %2, %3 : vector<8x128xf32>
    %cst_3 = arith.constant dense<0xFF800000> : vector<8x128xf32>
    %5 = vector.multi_reduction <maximumf>, %1, %cst_3 [1] : vector<8x64x128xf32> to vector<8x128xf32>
    %6 = arith.truncf %4 : vector<8x128xf32> to vector<8x128xbf16>
    %c0_4 = arith.constant 0 : index
    %c0_5 = arith.constant 0 : index
    %7 = vector.load %arg3[%c0_4, %c0_5] : memref<128x128xbf16, #tpu.memory_space<vmem>>, vector<128x128xbf16>
    %cst_6 = arith.constant dense<0.000000e+00> : vector<8x128xf32>
    %8 = tpu.matmul %6, %7, %cst_6 {dimension_numbers = #tpu.dot_dimension_numbers<[1], [0], [0], [1], [0, 0, 1, 1], [], []>} : vector<8x128xbf16>, vector<128x128xbf16>, vector<8x128xf32> -> vector<8x128xf32>
    %c0_7 = arith.constant 0 : index
    %c0_8 = arith.constant 0 : index
    %9 = vector.load %arg4[%c0_7, %c0_8] : memref<1x128xf32, #tpu.memory_space<vmem>>, vector<1x128xf32>
    %10 = vector.broadcast %9 : vector<1x128xf32> to vector<8x128xf32>
    %11 = arith.addf %8, %10 : vector<8x128xf32>
    %cst_9 = arith.constant dense<0xFF800000> : vector<8xf32>
    %12 = vector.multi_reduction <maximumf>, %11, %cst_9 [1] : vector<8x128xf32> to vector<8xf32>
    %13 = vector.shape_cast %12 : vector<8xf32> to vector<8x1xf32>
    %14 = vector.broadcast %13 : vector<8x1xf32> to vector<8x128xf32>
    %15 = arith.subf %11, %14 : vector<8x128xf32>
    %16 = math.exp %15 : vector<8x128xf32>
    %cst_10 = arith.constant dense<0.000000e+00> : vector<8xf32>
    %17 = vector.multi_reduction <add>, %16, %cst_10 [1] : vector<8x128xf32> to vector<8xf32>
    %18 = vector.shape_cast %17 : vector<8xf32> to vector<8x1xf32>
    %19 = tpu.reciprocal %18 {approx = true} : vector<8x1xf32> -> vector<8x1xf32>
    %20 = vector.broadcast %19 : vector<8x1xf32> to vector<8x128xf32>
    %21 = arith.mulf %16, %20 : vector<8x128xf32>
    %22 = arith.truncf %21 : vector<8x128xf32> to vector<8x128xbf16>
    %c0_11 = arith.constant 0 : index
    %c0_12 = arith.constant 0 : index
    %23 = vector.load %arg2[%c0_11, %c0_12] : memref<128x128xbf16, #tpu.memory_space<vmem>>, vector<128x128xbf16>
    %cst_13 = arith.constant dense<0.000000e+00> : vector<8x128xf32>
    %24 = tpu.matmul %22, %23, %cst_13 {dimension_numbers = #tpu.dot_dimension_numbers<[1], [0], [0], [1], [0, 0, 1, 1], [], []>} : vector<8x128xbf16>, vector<128x128xbf16>, vector<8x128xf32> -> vector<8x128xf32>
    %25 = arith.truncf %5 : vector<8x128xf32> to vector<8x128xbf16>
    %c0_14 = arith.constant 0 : index
    %c0_15 = arith.constant 0 : index
    %26 = vector.load %arg5[%c0_14, %c0_15] : memref<128x128xbf16, #tpu.memory_space<vmem>>, vector<128x128xbf16>
    %cst_16 = arith.constant dense<0.000000e+00> : vector<8x128xf32>
    %27 = tpu.matmul %25, %26, %cst_16 {dimension_numbers = #tpu.dot_dimension_numbers<[1], [0], [0], [1], [0, 0, 1, 1], [], []>} : vector<8x128xbf16>, vector<128x128xbf16>, vector<8x128xf32> -> vector<8x128xf32>
    %c0_17 = arith.constant 0 : index
    %c0_18 = arith.constant 0 : index
    %28 = vector.load %arg6[%c0_17, %c0_18] : memref<1x128xf32, #tpu.memory_space<vmem>>, vector<1x128xf32>
    %29 = vector.broadcast %28 : vector<1x128xf32> to vector<8x128xf32>
    %30 = arith.addf %27, %29 : vector<8x128xf32>
    %31 = math.tanh %30 : vector<8x128xf32>
    %32 = arith.mulf %31, %24 : vector<8x128xf32>
    %33 = arith.subf %5, %32 : vector<8x128xf32>
    %34 = arith.truncf %33 : vector<8x128xf32> to vector<8x128xbf16>
    %c0_19 = arith.constant 0 : index
    %c0_20 = arith.constant 0 : index
    %35 = vector.load %arg7[%c0_19, %c0_20] : memref<128x128xbf16, #tpu.memory_space<vmem>>, vector<128x128xbf16>
    %cst_21 = arith.constant dense<0.000000e+00> : vector<8x128xf32>
    %36 = tpu.matmul %34, %35, %cst_21 {dimension_numbers = #tpu.dot_dimension_numbers<[1], [0], [0], [1], [0, 0, 1, 1], [], []>} : vector<8x128xbf16>, vector<128x128xbf16>, vector<8x128xf32> -> vector<8x128xf32>
    %c0_22 = arith.constant 0 : index
    %c0_23 = arith.constant 0 : index
    %37 = vector.load %arg8[%c0_22, %c0_23] : memref<1x128xf32, #tpu.memory_space<vmem>>, vector<1x128xf32>
    %38 = vector.broadcast %37 : vector<1x128xf32> to vector<8x128xf32>
    %39 = arith.addf %36, %38 : vector<8x128xf32>
    %c0_24 = arith.constant 0 : index
    %c0_25 = arith.constant 0 : index
    %40 = vector.load %arg9[%c0_24, %c0_25] : memref<8x128xf32, #tpu.memory_space<vmem>>, vector<8x128xf32>
    tpu.vector_store %arg9[%c0_24, %c0_25], %39 {strides = array<i32>} : memref<8x128xf32, #tpu.memory_space<vmem>>, vector<8x128xf32>,
    return
  }
  func.func @transform_0(%arg0: i32) -> (i32, i32, i32) {
    %c0_i32 = arith.constant 0 : i32
    %c0_i32_0 = arith.constant 0 : i32
    %c0_i32_1 = arith.constant 0 : i32
    return %arg0, %c0_i32, %c0_i32_0 : i32, i32, i32
  }
  func.func @transform_1(%arg0: i32) -> (i32, i32) {
    %c0_i32 = arith.constant 0 : i32
    %c0_i32_0 = arith.constant 0 : i32
    %c0_i32_1 = arith.constant 0 : i32
    return %c0_i32, %c0_i32_0 : i32, i32
  }
  func.func @transform_2(%arg0: i32) -> (i32, i32) {
    %c0_i32 = arith.constant 0 : i32
    %c0_i32_0 = arith.constant 0 : i32
    %c0_i32_1 = arith.constant 0 : i32
    return %c0_i32, %c0_i32_0 : i32, i32
  }
  func.func @transform_3(%arg0: i32) -> (i32, i32) {
    %c0_i32 = arith.constant 0 : i32
    %c0_i32_0 = arith.constant 0 : i32
    %c0_i32_1 = arith.constant 0 : i32
    return %c0_i32, %c0_i32_0 : i32, i32
  }
  func.func @transform_4(%arg0: i32) -> (i32, i32) {
    %c0_i32 = arith.constant 0 : i32
    %c0_i32_0 = arith.constant 0 : i32
    %c0_i32_1 = arith.constant 0 : i32
    return %c0_i32, %c0_i32_0 : i32, i32
  }
  func.func @transform_5(%arg0: i32) -> (i32, i32) {
    %c0_i32 = arith.constant 0 : i32
    %c0_i32_0 = arith.constant 0 : i32
    %c0_i32_1 = arith.constant 0 : i32
    return %c0_i32, %c0_i32_0 : i32, i32
  }
  func.func @transform_6(%arg0: i32) -> (i32, i32) {
    %c0_i32 = arith.constant 0 : i32
    %c0_i32_0 = arith.constant 0 : i32
    %c0_i32_1 = arith.constant 0 : i32
    return %c0_i32, %c0_i32_0 : i32, i32
  }
  func.func @transform_7(%arg0: i32) -> (i32, i32) {
    %c0_i32 = arith.constant 0 : i32
    %c0_i32_0 = arith.constant 0 : i32
    %c0_i32_1 = arith.constant 0 : i32
    return %c0_i32, %c0_i32_0 : i32, i32
  }
  func.func @transform_8(%arg0: i32) -> (i32, i32) {
    %c0_i32 = arith.constant 0 : i32
    %c0_i32_0 = arith.constant 0 : i32
    return %arg0, %c0_i32 : i32, i32
  }
}

</mosaic_0001>

<llo_original>
// kernel: tpu_custom_call.1
$region0: #{tpu_custom_call.1}
  #allocation0 [shape = 'u32[]', space=smem, size = 0x4, offset = 0x4, fixed_abs, tag = 'smem constant byte address 0x4 - core index']
  #allocation1 [shape = 'u32[144,128]{1,0:T(1,128)}', space=vmem, size = 0x12000, scoped, tag = 'internal scratch']
  %s0 = inlined_call_operand.hbm [shape: bf16[8,64,128], index: 0, kind: input, shape index: {}]
  %s1 = inlined_call_operand.hbm [shape: bf16[128,128], index: 1, kind: input, shape index: {}]
  %s2 = inlined_call_operand.hbm [shape: bf16[128,128], index: 2, kind: input, shape index: {}]
  %s3 = inlined_call_operand.vmem [shape: f32[1,128], index: 3, kind: input, shape index: {}]
  %s4 = inlined_call_operand.hbm [shape: bf16[128,128], index: 4, kind: input, shape index: {}]
  %s5 = inlined_call_operand.vmem [shape: f32[1,128], index: 5, kind: input, shape index: {}]
  %s6 = inlined_call_operand.hbm [shape: bf16[128,128], index: 6, kind: input, shape index: {}]
  %s7 = inlined_call_operand.vmem [shape: f32[1,128], index: 7, kind: input, shape index: {}]
  %s8 = inlined_call_operand.hbm [shape: f32[8,128], index: 8, kind: output, shape index: {}]
  %s9 = sld [smem:[#allocation0]]
  $region62: #{tpu_custom_call.1} parent=0
    _
  %s11 = ssub.s32 1, %s9
  %s12 = scalar_select 0, %s11, %s9
  $region1: #{tpu_custom_call.1} parent=0
    #allocation2 [shape = 'u8[131072]{0}', space=vmem, size = 0x20000, scoped, tag = 'input window, operand 0, single buffered']
    #allocation3 [shape = 's32[1]{0}', space=sflag, size = 0x4, scoped, tag = 'scoped memory for tpu_custom_call.1']
    #allocation4 [shape = 's32[1]{0}', space=sflag, size = 0x4, scoped, tag = 'scoped memory for tpu_custom_call.1']
    #allocation5 [shape = 'u8[32768]{0}', space=vmem, size = 0x8000, scoped, tag = 'input window, operand 1, single buffered']
    #allocation6 [shape = 's32[1]{0}', space=sflag, size = 0x4, scoped, tag = 'scoped memory for tpu_custom_call.1']
    #allocation7 [shape = 'u8[32768]{0}', space=vmem, size = 0x8000, scoped, tag = 'input window, operand 2, single buffered']
    #allocation8 [shape = 'u8[32768]{0}', space=vmem, size = 0x8000, scoped, tag = 'input window, operand 4, single buffered']
    #allocation9 [shape = 's32[1]{0}', space=sflag, size = 0x4, scoped, tag = 'scoped memory for tpu_custom_call.1']
    #allocation10 [shape = 'u8[32768]{0}', space=vmem, size = 0x8000, scoped, tag = 'input window, operand 6, single buffered']
    #allocation11 [shape = 'u8[4096]{0}', space=vmem, size = 0x1000, scoped, tag = 'output window, operand 0, single buffered']
    %13 = vsyncpa [#allocation3], 0
    %14 = vsyncpa [#allocation6], 0
    %15 = vsyncpa [#allocation9], 0
    %16 = vsyncpa [#allocation4], 0
    // Predicated region
    $region2: #{tpu_custom_call.1} parent=1 // pred_check
      _
    $region3: #{tpu_custom_call.1} parent=1 // pred_check_branch
      %18 = sbr.rel (0) target = $region5
    $region4: #{tpu_custom_call.1} parent=1 // pred_region
      %s20 = ssub.s32 4096, 4096
      %21 = vsyncadd [#allocation3], %s20
      %s22 = sshll.u32 [#allocation2], 4
      %s23 = int_to_ptr.vmem [resolvable:$true] %s22
      %28 = dma.hbm_to_vmem [thread:$0]  %s0, 4096, %s23, [#allocation3], 64, 64, 4
    $region5: #{tpu_custom_call.1} parent=1 // pred_fallthru
      _
    // Predicated region
    $region6: #{tpu_custom_call.1} parent=1 // pred_check
      _
    $region7: #{tpu_custom_call.1} parent=1 // pred_check_branch
      %30 = sbr.rel (0) target = $region9
    $region8: #{tpu_custom_call.1} parent=1 // pred_region
      %s32 = ssub.s32 1024, 1024
      %33 = vsyncadd [#allocation6], %s32
      %s34 = sshll.u32 [#allocation5], 4
      %s35 = int_to_ptr.vmem [resolvable:$true] %s34
      %40 = dma.hbm_to_vmem [thread:$0]  %s1, 1024, %s35, [#allocation6], 64, 64, 4
    $region9: #{tpu_custom_call.1} parent=1 // pred_fallthru
      _
    // Predicated region
    $region10: #{tpu_custom_call.1} parent=1 // pred_check
      _
    $region11: #{tpu_custom_call.1} parent=1 // pred_check_branch
      %42 = sbr.rel (0) target = $region13
    $region12: #{tpu_custom_call.1} parent=1 // pred_region
      %s44 = ssub.s32 1024, 1024
      %45 = vsyncadd [#allocation6], %s44
      %s46 = sshll.u32 [#allocation7], 4
      %s47 = int_to_ptr.vmem [resolvable:$true] %s46
      %52 = dma.hbm_to_vmem [thread:$0]  %s2, 1024, %s47, [#allocation6], 64, 64, 4
    $region13: #{tpu_custom_call.1} parent=1 // pred_fallthru
      _
    // Predicated region
    $region14: #{tpu_custom_call.1} parent=1 // pred_check
      _
    $region15: #{tpu_custom_call.1} parent=1 // pred_check_branch
      %54 = sbr.rel (0) target = $region17
    $region16: #{tpu_custom_call.1} parent=1 // pred_region
      _
    $region17: #{tpu_custom_call.1} parent=1 // pred_fallthru
      _
    // Predicated region
    $region18: #{tpu_custom_call.1} parent=1 // pred_check
      _
    $region19: #{tpu_custom_call.1} parent=1 // pred_check_branch
      %56 = sbr.rel (0) target = $region21
    $region20: #{tpu_custom_call.1} parent=1 // pred_region
      %s58 = ssub.s32 1024, 1024
      %59 = vsyncadd [#allocation9], %s58
      %s60 = sshll.u32 [#allocation8], 4
      %s61 = int_to_ptr.vmem [resolvable:$true] %s60
      %66 = dma.hbm_to_vmem [thread:$0]  %s4, 1024, %s61, [#allocation9], 64, 64, 4
    $region21: #{tpu_custom_call.1} parent=1 // pred_fallthru
      _
    // Predicated region
    $region22: #{tpu_custom_call.1} parent=1 // pred_check
      _
    $region23: #{tpu_custom_call.1} parent=1 // pred_check_branch
      %68 = sbr.rel (0) target = $region25
    $region24: #{tpu_custom_call.1} parent=1 // pred_region
      _
    $region25: #{tpu_custom_call.1} parent=1 // pred_fallthru
      _
    // Predicated region
    $region26: #{tpu_custom_call.1} parent=1 // pred_check
      _
    $region27: #{tpu_custom_call.1} parent=1 // pred_check_branch
      %70 = sbr.rel (0) target = $region29
    $region28: #{tpu_custom_call.1} parent=1 // pred_region
      %s72 = ssub.s32 1024, 1024
      %73 = vsyncadd [#allocation9], %s72
      %s74 = sshll.u32 [#allocation10], 4
      %s75 = int_to_ptr.vmem [resolvable:$true] %s74
      %80 = dma.hbm_to_vmem [thread:$0]  %s6, 1024, %s75, [#allocation9], 64, 64, 4
    $region29: #{tpu_custom_call.1} parent=1 // pred_fallthru
      _
    // Predicated region
    $region30: #{tpu_custom_call.1} parent=1 // pred_check
      _
    $region31: #{tpu_custom_call.1} parent=1 // pred_check_branch
      %82 = sbr.rel (0) target = $region33
    $region32: #{tpu_custom_call.1} parent=1 // pred_region
      _
    $region33: #{tpu_custom_call.1} parent=1 // pred_fallthru
      _
    // Predicated region
    $region34: #{tpu_custom_call.1} parent=1 // pred_check
      _
    $region35: #{tpu_custom_call.1} parent=1 // pred_check_branch
      %84 = sbr.rel (0) target = $region37
    $region36: #{tpu_custom_call.1} parent=1 // pred_region
      %85 = dma.done [#allocation3], 4096
    $region37: #{tpu_custom_call.1} parent=1 // pred_fallthru
      _
    // Predicated region
    $region38: #{tpu_custom_call.1} parent=1 // pred_check
      _
    $region39: #{tpu_custom_call.1} parent=1 // pred_check_branch
      %87 = sbr.rel (0) target = $region41
    $region40: #{tpu_custom_call.1} parent=1 // pred_region
      %88 = dma.done [#allocation6], 1024
    $region41: #{tpu_custom_call.1} parent=1 // pred_fallthru
      _
    // Predicated region
    $region42: #{tpu_custom_call.1} parent=1 // pred_check
      _
    $region43: #{tpu_custom_call.1} parent=1 // pred_check_branch
      %90 = sbr.rel (0) target = $region45
    $region44: #{tpu_custom_call.1} parent=1 // pred_region
      %91 = dma.done [#allocation6], 1024
    $region45: #{tpu_custom_call.1} parent=1 // pred_fallthru
      _
    // Predicated region
    $region46: #{tpu_custom_call.1} parent=1 // pred_check
      _
    $region47: #{tpu_custom_call.1} parent=1 // pred_check_branch
      %93 = sbr.rel (0) target = $region49
    $region48: #{tpu_custom_call.1} parent=1 // pred_region
      %94 = dma.done [#allocation9], 1024
    $region49: #{tpu_custom_call.1} parent=1 // pred_fallthru
      _
    // Predicated region
    $region50: #{tpu_custom_call.1} parent=1 // pred_check
      _
    $region51: #{tpu_custom_call.1} parent=1 // pred_check_branch
      %96 = sbr.rel (0) target = $region53
    $region52: #{tpu_custom_call.1} parent=1 // pred_region
      %97 = dma.done [#allocation9], 1024
    $region53: #{tpu_custom_call.1} parent=1 // pred_fallthru
      _
    %v99 = vld [vmem:[#allocation2] sm:$0xf]
    %v100 = vld [vmem:[#allocation2 + $0x4] sm:$0xf]
    %v101 = vld [vmem:[#allocation2 + $0x8] sm:$0xf]
    %v102 = vld [vmem:[#allocation2 + $0xc] sm:$0xf]
    %v103 = vld [vmem:[#allocation2 + $0x10] sm:$0xf]
    %v104 = vld [vmem:[#allocation2 + $0x14] sm:$0xf]
    %v105 = vld [vmem:[#allocation2 + $0x18] sm:$0xf]
    %v106 = vld [vmem:[#allocation2 + $0x1c] sm:$0xf]
    %v107 = vld [vmem:[#allocation2 + $0x20] sm:$0xf]
    %v108 = vld [vmem:[#allocation2 + $0x24] sm:$0xf]
    %v109 = vld [vmem:[#allocation2 + $0x28] sm:$0xf]
    %v110 = vld [vmem:[#allocation2 + $0x2c] sm:$0xf]
    %v111 = vld [vmem:[#allocation2 + $0x30] sm:$0xf]
    %v112 = vld [vmem:[#allocation2 + $0x34] sm:$0xf]
    %v113 = vld [vmem:[#allocation2 + $0x38] sm:$0xf]
    %v114 = vld [vmem:[#allocation2 + $0x3c] sm:$0xf]
    %v115 = vld [vmem:[#allocation2 + $0x40] sm:$0xf]
    %v116 = vld [vmem:[#allocation2 + $0x44] sm:$0xf]
    %v117 = vld [vmem:[#allocation2 + $0x48] sm:$0xf]
    %v118 = vld [vmem:[#allocation2 + $0x4c] sm:$0xf]
    %v119 = vld [vmem:[#allocation2 + $0x50] sm:$0xf]
    %v120 = vld [vmem:[#allocation2 + $0x54] sm:$0xf]
    %v121 = vld [vmem:[#allocation2 + $0x58] sm:$0xf]
    %v122 = vld [vmem:[#allocation2 + $0x5c] sm:$0xf]
    %v123 = vld [vmem:[#allocation2 + $0x60] sm:$0xf]
    %v124 = vld [vmem:[#allocation2 + $0x64] sm:$0xf]
    %v125 = vld [vmem:[#allocation2 + $0x68] sm:$0xf]
    %v126 = vld [vmem:[#allocation2 + $0x6c] sm:$0xf]
    %v127 = vld [vmem:[#allocation2 + $0x70] sm:$0xf]
    %v128 = vld [vmem:[#allocation2 + $0x74] sm:$0xf]
    %v129 = vld [vmem:[#allocation2 + $0x78] sm:$0xf]
    %v130 = vld [vmem:[#allocation2 + $0x7c] sm:$0xf]
    %v131 = vld [vmem:[#allocation2 + $0x80] sm:$0xf]
    %v132 = vld [vmem:[#allocation2 + $0x84] sm:$0xf]
    %v133 = vld [vmem:[#allocation2 + $0x88] sm:$0xf]
    %v134 = vld [vmem:[#allocation2 + $0x8c] sm:$0xf]
    %v135 = vld [vmem:[#allocation2 + $0x90] sm:$0xf]
    %v136 = vld [vmem:[#allocation2 + $0x94] sm:$0xf]
    %v137 = vld [vmem:[#allocation2 + $0x98] sm:$0xf]
    %v138 = vld [vmem:[#allocation2 + $0x9c] sm:$0xf]
    %v139 = vld [vmem:[#allocation2 + $0xa0] sm:$0xf]
    %v140 = vld [vmem:[#allocation2 + $0xa4] sm:$0xf]
    %v141 = vld [vmem:[#allocation2 + $0xa8] sm:$0xf]
    %v142 = vld [vmem:[#allocation2 + $0xac] sm:$0xf]
    %v143 = vld [vmem:[#allocation2 + $0xb0] sm:$0xf]
    %v144 = vld [vmem:[#allocation2 + $0xb4] sm:$0xf]
    %v145 = vld [vmem:[#allocation2 + $0xb8] sm:$0xf]
    %v146 = vld [vmem:[#allocation2 + $0xbc] sm:$0xf]
    %v147 = vld [vmem:[#allocation2 + $0xc0] sm:$0xf]
    %v148 = vld [vmem:[#allocation2 + $0xc4] sm:$0xf]
    %v149 = vld [vmem:[#allocation2 + $0xc8] sm:$0xf]
    %v150 = vld [vmem:[#allocation2 + $0xcc] sm:$0xf]
    %v151 = vld [vmem:[#allocation2 + $0xd0] sm:$0xf]
    %v152 = vld [vmem:[#allocation2 + $0xd4] sm:$0xf]
    %v153 = vld [vmem:[#allocation2 + $0xd8] sm:$0xf]
    %v154 = vld [vmem:[#allocation2 + $0xdc] sm:$0xf]
    %v155 = vld [vmem:[#allocation2 + $0xe0] sm:$0xf]
    %v156 = vld [vmem:[#allocation2 + $0xe4] sm:$0xf]
    %v157 = vld [vmem:[#allocation2 + $0xe8] sm:$0xf]
    %v158 = vld [vmem:[#allocation2 + $0xec] sm:$0xf]
    %v159 = vld [vmem:[#allocation2 + $0xf0] sm:$0xf]
    %v160 = vld [vmem:[#allocation2 + $0xf4] sm:$0xf]
    %v161 = vld [vmem:[#allocation2 + $0xf8] sm:$0xf]
    %v162 = vld [vmem:[#allocation2 + $0xfc] sm:$0xf]
    %v163 = vunpack.c.l.bf16 %v99
    %v164 = vunpack.c.l.bf16 %v100
    %v165 = vunpack.c.l.bf16 %v101
    %v166 = vunpack.c.l.bf16 %v102
    %v167 = vunpack.c.l.bf16 %v103
    %v168 = vunpack.c.l.bf16 %v104
    %v169 = vunpack.c.l.bf16 %v105
    %v170 = vunpack.c.l.bf16 %v106
    %v171 = vunpack.c.l.bf16 %v107
    %v172 = vunpack.c.l.bf16 %v108
    %v173 = vunpack.c.l.bf16 %v109
    %v174 = vunpack.c.l.bf16 %v110
    %v175 = vunpack.c.l.bf16 %v111
    %v176 = vunpack.c.l.bf16 %v112
    %v177 = vunpack.c.l.bf16 %v113
    %v178 = vunpack.c.l.bf16 %v114
    %v179 = vunpack.c.l.bf16 %v115
    %v180 = vunpack.c.l.bf16 %v116
    %v181 = vunpack.c.l.bf16 %v117
    %v182 = vunpack.c.l.bf16 %v118
    %v183 = vunpack.c.l.bf16 %v119
    %v184 = vunpack.c.l.bf16 %v120
    %v185 = vunpack.c.l.bf16 %v121
    %v186 = vunpack.c.l.bf16 %v122
    %v187 = vunpack.c.l.bf16 %v123
    %v188 = vunpack.c.l.bf16 %v124
    %v189 = vunpack.c.l.bf16 %v125
    %v190 = vunpack.c.l.bf16 %v126
    %v191 = vunpack.c.l.bf16 %v127
    %v192 = vunpack.c.l.bf16 %v128
    %v193 = vunpack.c.l.bf16 %v129
    %v194 = vunpack.c.l.bf16 %v130
    %v195 = vunpack.c.l.bf16 %v131
    %v196 = vunpack.c.l.bf16 %v132
    %v197 = vunpack.c.l.bf16 %v133
    %v198 = vunpack.c.l.bf16 %v134
    %v199 = vunpack.c.l.bf16 %v135
    %v200 = vunpack.c.l.bf16 %v136
    %v201 = vunpack.c.l.bf16 %v137
    %v202 = vunpack.c.l.bf16 %v138
    %v203 = vunpack.c.l.bf16 %v139
    %v204 = vunpack.c.l.bf16 %v140
    %v205 = vunpack.c.l.bf16 %v141
    %v206 = vunpack.c.l.bf16 %v142
    %v207 = vunpack.c.l.bf16 %v143
    %v208 = vunpack.c.l.bf16 %v144
    %v209 = vunpack.c.l.bf16 %v145
    %v210 = vunpack.c.l.bf16 %v146
    %v211 = vunpack.c.l.bf16 %v147
    %v212 = vunpack.c.l.bf16 %v148
    %v213 = vunpack.c.l.bf16 %v149
    %v214 = vunpack.c.l.bf16 %v150
    %v215 = vunpack.c.l.bf16 %v151
    %v216 = vunpack.c.l.bf16 %v152
    %v217 = vunpack.c.l.bf16 %v153
    %v218 = vunpack.c.l.bf16 %v154
    %v219 = vunpack.c.l.bf16 %v155
    %v220 = vunpack.c.l.bf16 %v156
    %v221 = vunpack.c.l.bf16 %v157
    %v222 = vunpack.c.l.bf16 %v158
    %v223 = vunpack.c.l.bf16 %v159
    %v224 = vunpack.c.l.bf16 %v160
    %v225 = vunpack.c.l.bf16 %v161
    %v226 = vunpack.c.l.bf16 %v162
    %v227 = vadd.f32 %v163, %v164
    %v228 = vadd.f32 %v227, %v165
    %v229 = vadd.f32 %v228, %v166
    %v230 = vadd.f32 %v229, %v167
    %v231 = vadd.f32 %v230, %v168
    %v232 = vadd.f32 %v231, %v169
    %v233 = vadd.f32 %v232, %v170
    %v234 = vrot.slane %v233, 4
    %v235 = vadd.f32 %v233, %v234
    %v236 = vrot.slane %v235, 2
    %v237 = vadd.f32 %v235, %v236
    %v238 = vrot.slane %v237, 1
    %v239 = vadd.f32 %v237, %v238
    %v240 = vadd.f32 %v171, %v172
    %v241 = vadd.f32 %v240, %v173
    %v242 = vadd.f32 %v241, %v174
    %v243 = vadd.f32 %v242, %v175
    %v244 = vadd.f32 %v243, %v176
    %v245 = vadd.f32 %v244, %v177
    %v246 = vadd.f32 %v245, %v178
    %v247 = vrot.slane %v246, 4
    %v248 = vadd.f32 %v246, %v247
    %v249 = vrot.slane %v248, 2
    %v250 = vadd.f32 %v248, %v249
    %v251 = vrot.slane %v250, 1
    %v252 = vadd.f32 %v250, %v251
    %v253 = vadd.f32 %v179, %v180
    %v254 = vadd.f32 %v253, %v181
    %v255 = vadd.f32 %v254, %v182
    %v256 = vadd.f32 %v255, %v183
    %v257 = vadd.f32 %v256, %v184
    %v258 = vadd.f32 %v257, %v185
    %v259 = vadd.f32 %v258, %v186
    %v260 = vrot.slane %v259, 4
    %v261 = vadd.f32 %v259, %v260
    %v262 = vrot.slane %v261, 2
    %v263 = vadd.f32 %v261, %v262
    %v264 = vrot.slane %v263, 1
    %v265 = vadd.f32 %v263, %v264
    %v266 = vadd.f32 %v187, %v188
    %v267 = vadd.f32 %v266, %v189
    %v268 = vadd.f32 %v267, %v190
    %v269 = vadd.f32 %v268, %v191
    %v270 = vadd.f32 %v269, %v192
    %v271 = vadd.f32 %v270, %v193
    %v272 = vadd.f32 %v271, %v194
    %v273 = vrot.slane %v272, 4
    %v274 = vadd.f32 %v272, %v273
    %v275 = vrot.slane %v274, 2
    %v276 = vadd.f32 %v274, %v275
    %v277 = vrot.slane %v276, 1
    %v278 = vadd.f32 %v276, %v277
    %v279 = vadd.f32 %v195, %v196
    %v280 = vadd.f32 %v279, %v197
    %v281 = vadd.f32 %v280, %v198
    %v282 = vadd.f32 %v281, %v199
    %v283 = vadd.f32 %v282, %v200
    %v284 = vadd.f32 %v283, %v201
    %v285 = vadd.f32 %v284, %v202
    %v286 = vrot.slane %v285, 4
    %v287 = vadd.f32 %v285, %v286
    %v288 = vrot.slane %v287, 2
    %v289 = vadd.f32 %v287, %v288
    %v290 = vrot.slane %v289, 1
    %v291 = vadd.f32 %v289, %v290
    %v292 = vadd.f32 %v203, %v204
    %v293 = vadd.f32 %v292, %v205
    %v294 = vadd.f32 %v293, %v206
    %v295 = vadd.f32 %v294, %v207
    %v296 = vadd.f32 %v295, %v208
    %v297 = vadd.f32 %v296, %v209
    %v298 = vadd.f32 %v297, %v210
    %v299 = vrot.slane %v298, 4
    %v300 = vadd.f32 %v298, %v299
    %v301 = vrot.slane %v300, 2
    %v302 = vadd.f32 %v300, %v301
    %v303 = vrot.slane %v302, 1
    %v304 = vadd.f32 %v302, %v303
    %v305 = vadd.f32 %v211, %v212
    %v306 = vadd.f32 %v305, %v213
    %v307 = vadd.f32 %v306, %v214
    %v308 = vadd.f32 %v307, %v215
    %v309 = vadd.f32 %v308, %v216
    %v310 = vadd.f32 %v309, %v217
    %v311 = vadd.f32 %v310, %v218
    %v312 = vrot.slane %v311, 4
    %v313 = vadd.f32 %v311, %v312
    %v314 = vrot.slane %v313, 2
    %v315 = vadd.f32 %v313, %v314
    %v316 = vrot.slane %v315, 1
    %v317 = vadd.f32 %v315, %v316
    %v318 = vadd.f32 %v219, %v220
    %v319 = vadd.f32 %v318, %v221
    %v320 = vadd.f32 %v319, %v222
    %v321 = vadd.f32 %v320, %v223
    %v322 = vadd.f32 %v321, %v224
    %v323 = vadd.f32 %v322, %v225
    %v324 = vadd.f32 %v323, %v226
    %v325 = vrot.slane %v324, 4
    %v326 = vadd.f32 %v324, %v325
    %v327 = vrot.slane %v326, 2
    %v328 = vadd.f32 %v326, %v327
    %v329 = vrot.slane %v328, 1
    %v330 = vadd.f32 %v328, %v329
    %v331 = vmul.f32 %v239, 0.015625
    %v332 = vmul.f32 %v252, 0.015625
    %v333 = vmul.f32 %v265, 0.015625
    %v334 = vmul.f32 %v278, 0.015625
    %v335 = vmul.f32 %v291, 0.015625
    %v336 = vmul.f32 %v304, 0.015625
    %v337 = vmul.f32 %v317, 0.015625
    %v338 = vmul.f32 %v330, 0.015625
    %v339 = vmax.f32 %v163, %v164
    %v340 = vmax.f32 %v339, %v165
    %v341 = vmax.f32 %v340, %v166
    %v342 = vmax.f32 %v341, %v167
    %v343 = vmax.f32 %v342, %v168
    %v344 = vmax.f32 %v343, %v169
    %v345 = vmax.f32 %v344, %v170
    %v346 = vrot.slane %v345, 4
    %v347 = vmax.f32 %v345, %v346
    %v348 = vrot.slane %v347, 2
    %v349 = vmax.f32 %v347, %v348
    %v350 = vrot.slane %v349, 1
    %v351 = vmax.f32 %v349, %v350
    %v352 = vmax.f32 %v171, %v172
    %v353 = vmax.f32 %v352, %v173
    %v354 = vmax.f32 %v353, %v174
    %v355 = vmax.f32 %v354, %v175
    %v356 = vmax.f32 %v355, %v176
    %v357 = vmax.f32 %v356, %v177
    %v358 = vmax.f32 %v357, %v178
    %v359 = vrot.slane %v358, 4
    %v360 = vmax.f32 %v358, %v359
    %v361 = vrot.slane %v360, 2
    %v362 = vmax.f32 %v360, %v361
    %v363 = vrot.slane %v362, 1
    %v364 = vmax.f32 %v362, %v363
    %v365 = vmax.f32 %v179, %v180
    %v366 = vmax.f32 %v365, %v181
    %v367 = vmax.f32 %v366, %v182
    %v368 = vmax.f32 %v367, %v183
    %v369 = vmax.f32 %v368, %v184
    %v370 = vmax.f32 %v369, %v185
    %v371 = vmax.f32 %v370, %v186
    %v372 = vrot.slane %v371, 4
    %v373 = vmax.f32 %v371, %v372
    %v374 = vrot.slane %v373, 2
    %v375 = vmax.f32 %v373, %v374
    %v376 = vrot.slane %v375, 1
    %v377 = vmax.f32 %v375, %v376
    %v378 = vmax.f32 %v187, %v188
    %v379 = vmax.f32 %v378, %v189
    %v380 = vmax.f32 %v379, %v190
    %v381 = vmax.f32 %v380, %v191
    %v382 = vmax.f32 %v381, %v192
    %v383 = vmax.f32 %v382, %v193
    %v384 = vmax.f32 %v383, %v194
    %v385 = vrot.slane %v384, 4
    %v386 = vmax.f32 %v384, %v385
    %v387 = vrot.slane %v386, 2
    %v388 = vmax.f32 %v386, %v387
    %v389 = vrot.slane %v388, 1
    %v390 = vmax.f32 %v388, %v389
    %v391 = vmax.f32 %v195, %v196
    %v392 = vmax.f32 %v391, %v197
    %v393 = vmax.f32 %v392, %v198
    %v394 = vmax.f32 %v393, %v199
    %v395 = vmax.f32 %v394, %v200
    %v396 = vmax.f32 %v395, %v201
    %v397 = vmax.f32 %v396, %v202
    %v398 = vrot.slane %v397, 4
    %v399 = vmax.f32 %v397, %v398
    %v400 = vrot.slane %v399, 2
    %v401 = vmax.f32 %v399, %v400
    %v402 = vrot.slane %v401, 1
    %v403 = vmax.f32 %v401, %v402
    %v404 = vmax.f32 %v203, %v204
    %v405 = vmax.f32 %v404, %v205
    %v406 = vmax.f32 %v405, %v206
    %v407 = vmax.f32 %v406, %v207
    %v408 = vmax.f32 %v407, %v208
    %v409 = vmax.f32 %v408, %v209
    %v410 = vmax.f32 %v409, %v210
    %v411 = vrot.slane %v410, 4
    %v412 = vmax.f32 %v410, %v411
    %v413 = vrot.slane %v412, 2
    %v414 = vmax.f32 %v412, %v413
    %v415 = vrot.slane %v414, 1
    %v416 = vmax.f32 %v414, %v415
    %v417 = vmax.f32 %v211, %v212
    %v418 = vmax.f32 %v417, %v213
    %v419 = vmax.f32 %v418, %v214
    %v420 = vmax.f32 %v419, %v215
    %v421 = vmax.f32 %v420, %v216
    %v422 = vmax.f32 %v421, %v217
    %v423 = vmax.f32 %v422, %v218
    %v424 = vrot.slane %v423, 4
    %v425 = vmax.f32 %v423, %v424
    %v426 = vrot.slane %v425, 2
    %v427 = vmax.f32 %v425, %v426
    %v428 = vrot.slane %v427, 1
    %v429 = vmax.f32 %v427, %v428
    %v430 = vmax.f32 %v219, %v220
    %v431 = vmax.f32 %v430, %v221
    %v432 = vmax.f32 %v431, %v222
    %v433 = vmax.f32 %v432, %v223
    %v434 = vmax.f32 %v433, %v224
    %v435 = vmax.f32 %v434, %v225
    %v436 = vmax.f32 %v435, %v226
    %v437 = vrot.slane %v436, 4
    %v438 = vmax.f32 %v436, %v437
    %v439 = vrot.slane %v438, 2
    %v440 = vmax.f32 %v438, %v439
    %v441 = vrot.slane %v440, 1
    %v442 = vmax.f32 %v440, %v441
    %v443 = vpack.c.bf16 %v331, %v331
    %v444 = vpack.c.bf16 %v332, %v332
    %v445 = vpack.c.bf16 %v333, %v333
    %v446 = vpack.c.bf16 %v334, %v334
    %v447 = vpack.c.bf16 %v335, %v335
    %v448 = vpack.c.bf16 %v336, %v336
    %v449 = vpack.c.bf16 %v337, %v337
    %v450 = vpack.c.bf16 %v338, %v338
    %v451 = vld [vmem:[#allocation7] sm:$0xf]
    %v452 = vld [vmem:[#allocation7 + $0x4] sm:$0xf]
    %v453 = vld [vmem:[#allocation7 + $0x8] sm:$0xf]
    %v454 = vld [vmem:[#allocation7 + $0xc] sm:$0xf]
    %v455 = vld [vmem:[#allocation7 + $0x10] sm:$0xf]
    %v456 = vld [vmem:[#allocation7 + $0x14] sm:$0xf]
    %v457 = vld [vmem:[#allocation7 + $0x18] sm:$0xf]
    %v458 = vld [vmem:[#allocation7 + $0x1c] sm:$0xf]
    %v459 = vld [vmem:[#allocation7 + $0x20] sm:$0xf]
    %v460 = vld [vmem:[#allocation7 + $0x24] sm:$0xf]
    %v461 = vld [vmem:[#allocation7 + $0x28] sm:$0xf]
    %v462 = vld [vmem:[#allocation7 + $0x2c] sm:$0xf]
    %v463 = vld [vmem:[#allocation7 + $0x30] sm:$0xf]
    %v464 = vld [vmem:[#allocation7 + $0x34] sm:$0xf]
    %v465 = vld [vmem:[#allocation7 + $0x38] sm:$0xf]
    %v466 = vld [vmem:[#allocation7 + $0x3c] sm:$0xf]
    %v467 = vld [vmem:[%s3] sm:$0x1]
    %v469 = vlaneseq
    %v470 = vshrl.u32 %v469, 7
    %v471 = vsub.s32 0, %v470
    %v472 = vrot.slane %v467, %v471
    %v482 = vunpack.c.l.b16 %v443
    %v483 = vunpack.c.l.b16 %v444
    %v484 = vunpack.c.l.b16 %v445
    %v485 = vunpack.c.l.b16 %v446
    %v486 = vunpack.c.l.b16 %v447
    %v487 = vunpack.c.l.b16 %v448
    %v488 = vunpack.c.l.b16 %v449
    %v489 = vunpack.c.l.b16 %v450
    %vm490 = vcmask 1041409
    %v491 = vsel %vm490, %v483, %v482
    %vm492 = vcmask 1042434
    %v493 = vsel %vm492, %v484, %v491
    %vm494 = vcmask 1043459
    %v495 = vsel %vm494, %v485, %v493
    %vm496 = vcmask 1044484
    %v497 = vsel %vm496, %v486, %v495
    %vm498 = vcmask 1045509
    %v499 = vsel %vm498, %v487, %v497
    %vm500 = vcmask 1046534
    %v501 = vsel %vm500, %v488, %v499
    %vm502 = vcmask 1047559
    %v503 = vsel %vm502, %v489, %v501
    %v504 = vpack.c.b16 %v503, %v503
    %v522 = vunpack.c.l.b16 %v451
    %v523 = vunpack.c.l.b16 %v452
    %v524 = vunpack.c.l.b16 %v453
    %v525 = vunpack.c.l.b16 %v454
    %v526 = vunpack.c.l.b16 %v455
    %v527 = vunpack.c.l.b16 %v456
    %v528 = vunpack.c.l.b16 %v457
    %v529 = vunpack.c.l.b16 %v458
    %v530 = vunpack.c.l.b16 %v459
    %v531 = vunpack.c.l.b16 %v460
    %v532 = vunpack.c.l.b16 %v461
    %v533 = vunpack.c.l.b16 %v462
    %v534 = vunpack.c.l.b16 %v463
    %v535 = vunpack.c.l.b16 %v464
    %v536 = vunpack.c.l.b16 %v465
    %v537 = vunpack.c.l.b16 %v466
    %v538 = vpack.c.b16 %v523, %v522
    %v539 = vpack.c.b16 %v525, %v524
    %v540 = vpack.c.b16 %v527, %v526
    %v541 = vpack.c.b16 %v529, %v528
    %v542 = vpack.c.b16 %v531, %v530
    %v543 = vpack.c.b16 %v533, %v532
    %v544 = vpack.c.b16 %v535, %v534
    %v545 = vpack.c.b16 %v537, %v536
    %554 = vmatprep.subr.bf16.mxu0 0
    %555 = vmatpush1.bf16.msra.mxu0 %v538
    %556 = vmatprep.subr.bf16.mxu0 0
    %557 = vmatpush1.bf16.msra.mxu0 %v539
    %558 = vmatprep.subr.bf16.mxu0 0
    %559 = vmatpush1.bf16.msra.mxu0 %v540
    %560 = vmatprep.subr.bf16.mxu0 0
    %561 = vmatpush1.bf16.msra.mxu0 %v541
    %562 = vmatprep.subr.bf16.mxu0 0
    %563 = vmatpush1.bf16.msra.mxu0 %v542
    %564 = vmatprep.subr.bf16.mxu0 0
    %565 = vmatpush1.bf16.msra.mxu0 %v543
    %566 = vmatprep.subr.bf16.mxu0 0
    %567 = vmatpush1.bf16.msra.mxu0 %v544
    %568 = vmatprep.subr.bf16.mxu0 0
    %569 = vmatpush1.bf16.msra.mxu0 %v545
    %570 = vmatprep.subr.bf16.mxu0 0
    %571 = vmatpush1.bf16.msra.mxu0 0
    %572 = vmatprep.subr.bf16.mxu0 0
    %573 = vmatpush1.bf16.msra.mxu0 0
    %574 = vmatprep.subr.bf16.mxu0 0
    %575 = vmatpush1.bf16.msra.mxu0 0
    %576 = vmatprep.subr.bf16.mxu0 0
    %577 = vmatpush1.bf16.msra.mxu0 0
    %578 = vmatprep.subr.bf16.mxu0 0
    %579 = vmatpush1.bf16.msra.mxu0 0
    %580 = vmatprep.subr.bf16.mxu0 0
    %581 = vmatpush1.bf16.msra.mxu0 0
    %582 = vmatprep.subr.bf16.mxu0 0
    %583 = vmatpush1.bf16.msra.mxu0 0
    %584 = vmatprep.subr.bf16.mxu0 0
    %585 = vmatpush1.bf16.msra.mxu0 0
    %586 = vmatprep.mubr.bf16.mxu0 0
    %587 = vmatmul.mubr.bf16.gmra.mrb[0].mxu0 %v504
    %v588 = vpop.f32.mrb[0].mxu0
    %v589 = vadd.f32 %v472, %v588
    %v590 = vpop.f32.mrb[0].mxu0
    %v591 = vpop.f32.mrb[0].mxu0
    %v592 = vpop.f32.mrb[0].mxu0
    %593 = vdwg.mxu0
    %594 = vmax.xlane.f32.xlu0 %v589
    %v595 = vpop.xlane.xlu0 %594
    %v596 = vsub.f32 %v589, %v595
    %v597 = vmul.f32 %v596, 1.442695
    %v598 = vpow.pop %v597
    %599 = vadd.xlane.f32.xlu0 %v598
    %v600 = vpop.xlane.xlu0 %599
    %v601 = vrcp.pop %v600
    %v602 = vmul.f32 %v598, %v601
    %v603 = vpack.c.bf16 %v602, %v602
    %v604 = vld [vmem:[#allocation5] sm:$0xf]
    %v605 = vld [vmem:[#allocation5 + $0x4] sm:$0xf]
    %v606 = vld [vmem:[#allocation5 + $0x8] sm:$0xf]
    %v607 = vld [vmem:[#allocation5 + $0xc] sm:$0xf]
    %v608 = vld [vmem:[#allocation5 + $0x10] sm:$0xf]
    %v609 = vld [vmem:[#allocation5 + $0x14] sm:$0xf]
    %v610 = vld [vmem:[#allocation5 + $0x18] sm:$0xf]
    %v611 = vld [vmem:[#allocation5 + $0x1c] sm:$0xf]
    %v612 = vld [vmem:[#allocation5 + $0x20] sm:$0xf]
    %v613 = vld [vmem:[#allocation5 + $0x24] sm:$0xf]
    %v614 = vld [vmem:[#allocation5 + $0x28] sm:$0xf]
    %v615 = vld [vmem:[#allocation5 + $0x2c] sm:$0xf]
    %v616 = vld [vmem:[#allocation5 + $0x30] sm:$0xf]
    %v617 = vld [vmem:[#allocation5 + $0x34] sm:$0xf]
    %v618 = vld [vmem:[#allocation5 + $0x38] sm:$0xf]
    %v619 = vld [vmem:[#allocation5 + $0x3c] sm:$0xf]
    %v636 = vunpack.c.l.b16 %v604
    %v637 = vunpack.c.l.b16 %v605
    %v638 = vunpack.c.l.b16 %v606
    %v639 = vunpack.c.l.b16 %v607
    %v640 = vunpack.c.l.b16 %v608
    %v641 = vunpack.c.l.b16 %v609
    %v642 = vunpack.c.l.b16 %v610
    %v643 = vunpack.c.l.b16 %v611
    %v644 = vunpack.c.l.b16 %v612
    %v645 = vunpack.c.l.b16 %v613
    %v646 = vunpack.c.l.b16 %v614
    %v647 = vunpack.c.l.b16 %v615
    %v648 = vunpack.c.l.b16 %v616
    %v649 = vunpack.c.l.b16 %v617
    %v650 = vunpack.c.l.b16 %v618
    %v651 = vunpack.c.l.b16 %v619
    %v652 = vpack.c.b16 %v637, %v636
    %v653 = vpack.c.b16 %v639, %v638
    %v654 = vpack.c.b16 %v641, %v640
    %v655 = vpack.c.b16 %v643, %v642
    %v656 = vpack.c.b16 %v645, %v644
    %v657 = vpack.c.b16 %v647, %v646
    %v658 = vpack.c.b16 %v649, %v648
    %v659 = vpack.c.b16 %v651, %v650
    %668 = vmatprep.subr.bf16.mxu0 0
    %669 = vmatpush1.bf16.msra.mxu0 %v652
    %670 = vmatprep.subr.bf16.mxu0 0
    %671 = vmatpush1.bf16.msra.mxu0 %v653
    %672 = vmatprep.subr.bf16.mxu0 0
    %673 = vmatpush1.bf16.msra.mxu0 %v654
    %674 = vmatprep.subr.bf16.mxu0 0
    %675 = vmatpush1.bf16.msra.mxu0 %v655
    %676 = vmatprep.subr.bf16.mxu0 0
    %677 = vmatpush1.bf16.msra.mxu0 %v656
    %678 = vmatprep.subr.bf16.mxu0 0
    %679 = vmatpush1.bf16.msra.mxu0 %v657
    %680 = vmatprep.subr.bf16.mxu0 0
    %681 = vmatpush1.bf16.msra.mxu0 %v658
    %682 = vmatprep.subr.bf16.mxu0 0
    %683 = vmatpush1.bf16.msra.mxu0 %v659
    %684 = vmatprep.subr.bf16.mxu0 0
    %685 = vmatpush1.bf16.msra.mxu0 0
    %686 = vmatprep.subr.bf16.mxu0 0
    %687 = vmatpush1.bf16.msra.mxu0 0
    %688 = vmatprep.subr.bf16.mxu0 0
    %689 = vmatpush1.bf16.msra.mxu0 0
    %690 = vmatprep.subr.bf16.mxu0 0
    %691 = vmatpush1.bf16.msra.mxu0 0
    %692 = vmatprep.subr.bf16.mxu0 0
    %693 = vmatpush1.bf16.msra.mxu0 0
    %694 = vmatprep.subr.bf16.mxu0 0
    %695 = vmatpush1.bf16.msra.mxu0 0
    %696 = vmatprep.subr.bf16.mxu0 0
    %697 = vmatpush1.bf16.msra.mxu0 0
    %698 = vmatprep.subr.bf16.mxu0 0
    %699 = vmatpush1.bf16.msra.mxu0 0
    %700 = vmatprep.mubr.bf16.mxu0 0
    %701 = vmatmul.mubr.bf16.gmra.mrb[0].mxu0 %v603
    %v702 = vpop.f32.mrb[0].mxu0
    %v703 = vadd.f32 0.0, %v702
    %v704 = vpop.f32.mrb[0].mxu0
    %v705 = vpop.f32.mrb[0].mxu0
    %v706 = vpop.f32.mrb[0].mxu0
    %707 = vdwg.mxu0
    %v708 = vpack.c.bf16 %v351, %v351
    %v709 = vpack.c.bf16 %v364, %v364
    %v710 = vpack.c.bf16 %v377, %v377
    %v711 = vpack.c.bf16 %v390, %v390
    %v712 = vpack.c.bf16 %v403, %v403
    %v713 = vpack.c.bf16 %v416, %v416
    %v714 = vpack.c.bf16 %v429, %v429
    %v715 = vpack.c.bf16 %v442, %v442
    %v716 = vld [vmem:[#allocation8] sm:$0xf]
    %v717 = vld [vmem:[#allocation8 + $0x4] sm:$0xf]
    %v718 = vld [vmem:[#allocation8 + $0x8] sm:$0xf]
    %v719 = vld [vmem:[#allocation8 + $0xc] sm:$0xf]
    %v720 = vld [vmem:[#allocation8 + $0x10] sm:$0xf]
    %v721 = vld [vmem:[#allocation8 + $0x14] sm:$0xf]
    %v722 = vld [vmem:[#allocation8 + $0x18] sm:$0xf]
    %v723 = vld [vmem:[#allocation8 + $0x1c] sm:$0xf]
    %v724 = vld [vmem:[#allocation8 + $0x20] sm:$0xf]
    %v725 = vld [vmem:[#allocation8 + $0x24] sm:$0xf]
    %v726 = vld [vmem:[#allocation8 + $0x28] sm:$0xf]
    %v727 = vld [vmem:[#allocation8 + $0x2c] sm:$0xf]
    %v728 = vld [vmem:[#allocation8 + $0x30] sm:$0xf]
    %v729 = vld [vmem:[#allocation8 + $0x34] sm:$0xf]
    %v730 = vld [vmem:[#allocation8 + $0x38] sm:$0xf]
    %v731 = vld [vmem:[#allocation8 + $0x3c] sm:$0xf]
    %v732 = vld [vmem:[%s5] sm:$0x1]
    %v734 = vlaneseq
    %v735 = vshrl.u32 %v734, 7
    %v736 = vsub.s32 0, %v735
    %v737 = vrot.slane %v732, %v736
    %v747 = vunpack.c.l.b16 %v708
    %v748 = vunpack.c.l.b16 %v709
    %v749 = vunpack.c.l.b16 %v710
    %v750 = vunpack.c.l.b16 %v711
    %v751 = vunpack.c.l.b16 %v712
    %v752 = vunpack.c.l.b16 %v713
    %v753 = vunpack.c.l.b16 %v714
    %v754 = vunpack.c.l.b16 %v715
    %v755 = vsel %vm490, %v748, %v747
    %v756 = vsel %vm492, %v749, %v755
    %v757 = vsel %vm494, %v750, %v756
    %v758 = vsel %vm496, %v751, %v757
    %v759 = vsel %vm498, %v752, %v758
    %v760 = vsel %vm500, %v753, %v759
    %v761 = vsel %vm502, %v754, %v760
    %v762 = vpack.c.b16 %v761, %v761
    %v780 = vunpack.c.l.b16 %v716
    %v781 = vunpack.c.l.b16 %v717
    %v782 = vunpack.c.l.b16 %v718
    %v783 = vunpack.c.l.b16 %v719
    %v784 = vunpack.c.l.b16 %v720
    %v785 = vunpack.c.l.b16 %v721
    %v786 = vunpack.c.l.b16 %v722
    %v787 = vunpack.c.l.b16 %v723
    %v788 = vunpack.c.l.b16 %v724
    %v789 = vunpack.c.l.b16 %v725
    %v790 = vunpack.c.l.b16 %v726
    %v791 = vunpack.c.l.b16 %v727
    %v792 = vunpack.c.l.b16 %v728
    %v793 = vunpack.c.l.b16 %v729
    %v794 = vunpack.c.l.b16 %v730
    %v795 = vunpack.c.l.b16 %v731
    %v796 = vpack.c.b16 %v781, %v780
    %v797 = vpack.c.b16 %v783, %v782
    %v798 = vpack.c.b16 %v785, %v784
    %v799 = vpack.c.b16 %v787, %v786
    %v800 = vpack.c.b16 %v789, %v788
    %v801 = vpack.c.b16 %v791, %v790
    %v802 = vpack.c.b16 %v793, %v792
    %v803 = vpack.c.b16 %v795, %v794
    %812 = vmatprep.subr.bf16.mxu0 0
    %813 = vmatpush1.bf16.msra.mxu0 %v796
    %814 = vmatprep.subr.bf16.mxu0 0
    %815 = vmatpush1.bf16.msra.mxu0 %v797
    %816 = vmatprep.subr.bf16.mxu0 0
    %817 = vmatpush1.bf16.msra.mxu0 %v798
    %818 = vmatprep.subr.bf16.mxu0 0
    %819 = vmatpush1.bf16.msra.mxu0 %v799
    %820 = vmatprep.subr.bf16.mxu0 0
    %821 = vmatpush1.bf16.msra.mxu0 %v800
    %822 = vmatprep.subr.bf16.mxu0 0
    %823 = vmatpush1.bf16.msra.mxu0 %v801
    %824 = vmatprep.subr.bf16.mxu0 0
    %825 = vmatpush1.bf16.msra.mxu0 %v802
    %826 = vmatprep.subr.bf16.mxu0 0
    %827 = vmatpush1.bf16.msra.mxu0 %v803
    %828 = vmatprep.subr.bf16.mxu0 0
    %829 = vmatpush1.bf16.msra.mxu0 0
    %830 = vmatprep.subr.bf16.mxu0 0
    %831 = vmatpush1.bf16.msra.mxu0 0
    %832 = vmatprep.subr.bf16.mxu0 0
    %833 = vmatpush1.bf16.msra.mxu0 0
    %834 = vmatprep.subr.bf16.mxu0 0
    %835 = vmatpush1.bf16.msra.mxu0 0
    %836 = vmatprep.subr.bf16.mxu0 0
    %837 = vmatpush1.bf16.msra.mxu0 0
    %838 = vmatprep.subr.bf16.mxu0 0
    %839 = vmatpush1.bf16.msra.mxu0 0
    %840 = vmatprep.subr.bf16.mxu0 0
    %841 = vmatpush1.bf16.msra.mxu0 0
    %842 = vmatprep.subr.bf16.mxu0 0
    %843 = vmatpush1.bf16.msra.mxu0 0
    %844 = vmatprep.mubr.bf16.mxu0 0
    %845 = vmatmul.mubr.bf16.gmra.mrb[0].mxu0 %v762
    %v846 = vpop.f32.mrb[0].mxu0
    %v847 = vadd.f32 %v737, %v846
    %v848 = vpop.f32.mrb[0].mxu0
    %v849 = vpop.f32.mrb[0].mxu0
    %v850 = vpop.f32.mrb[0].mxu0
    %851 = vdwg.mxu0
    %v852 = vtanh.pop %v847
    %v853 = vmul.f32 %v852, %v703
    %v855 = vrot.slane %v853, 1
    %v856 = vrot.slane %v853, 2
    %v857 = vrot.slane %v853, 3
    %v858 = vrot.slane %v853, 4
    %v859 = vrot.slane %v853, 5
    %v860 = vrot.slane %v853, 6
    %v861 = vrot.slane %v853, 7
    %v870 = vsub.f32 %v351, %v853
    %v871 = vsub.f32 %v364, %v855
    %v872 = vsub.f32 %v377, %v856
    %v873 = vsub.f32 %v390, %v857
    %v874 = vsub.f32 %v403, %v858
    %v875 = vsub.f32 %v416, %v859
    %v876 = vsub.f32 %v429, %v860
    %v877 = vsub.f32 %v442, %v861
    %v878 = vpack.c.bf16 %v870, %v870
    %v879 = vpack.c.bf16 %v871, %v871
    %v880 = vpack.c.bf16 %v872, %v872
    %v881 = vpack.c.bf16 %v873, %v873
    %v882 = vpack.c.bf16 %v874, %v874
    %v883 = vpack.c.bf16 %v875, %v875
    %v884 = vpack.c.bf16 %v876, %v876
    %v885 = vpack.c.bf16 %v877, %v877
    %v886 = vld [vmem:[#allocation10] sm:$0xf]
    %v887 = vld [vmem:[#allocation10 + $0x4] sm:$0xf]
    %v888 = vld [vmem:[#allocation10 + $0x8] sm:$0xf]
    %v889 = vld [vmem:[#allocation10 + $0xc] sm:$0xf]
    %v890 = vld [vmem:[#allocation10 + $0x10] sm:$0xf]
    %v891 = vld [vmem:[#allocation10 + $0x14] sm:$0xf]
    %v892 = vld [vmem:[#allocation10 + $0x18] sm:$0xf]
    %v893 = vld [vmem:[#allocation10 + $0x1c] sm:$0xf]
    %v894 = vld [vmem:[#allocation10 + $0x20] sm:$0xf]
    %v895 = vld [vmem:[#allocation10 + $0x24] sm:$0xf]
    %v896 = vld [vmem:[#allocation10 + $0x28] sm:$0xf]
    %v897 = vld [vmem:[#allocation10 + $0x2c] sm:$0xf]
    %v898 = vld [vmem:[#allocation10 + $0x30] sm:$0xf]
    %v899 = vld [vmem:[#allocation10 + $0x34] sm:$0xf]
    %v900 = vld [vmem:[#allocation10 + $0x38] sm:$0xf]
    %v901 = vld [vmem:[#allocation10 + $0x3c] sm:$0xf]
    %v902 = vld [vmem:[%s7] sm:$0x1]
    %v904 = vlaneseq
    %v905 = vshrl.u32 %v904, 7
    %v906 = vsub.s32 0, %v905
    %v907 = vrot.slane %v902, %v906
    %v917 = vunpack.c.l.b16 %v878
    %v918 = vunpack.c.l.b16 %v879
    %v919 = vunpack.c.l.b16 %v880
    %v920 = vunpack.c.l.b16 %v881
    %v921 = vunpack.c.l.b16 %v882
    %v922 = vunpack.c.l.b16 %v883
    %v923 = vunpack.c.l.b16 %v884
    %v924 = vunpack.c.l.b16 %v885
    %v925 = vrot.slane %v918, 7
    %v926 = vsel %vm490, %v925, %v917
    %v927 = vrot.slane %v919, 6
    %v928 = vsel %vm492, %v927, %v926
    %v929 = vrot.slane %v920, 5
    %v930 = vsel %vm494, %v929, %v928
    %v931 = vrot.slane %v921, 4
    %v932 = vsel %vm496, %v931, %v930
    %v933 = vrot.slane %v922, 3
    %v934 = vsel %vm498, %v933, %v932
    %v935 = vrot.slane %v923, 2
    %v936 = vsel %vm500, %v935, %v934
    %v937 = vrot.slane %v924, 1
    %v938 = vsel %vm502, %v937, %v936
    %v939 = vpack.c.b16 %v938, %v938
    %v957 = vunpack.c.l.b16 %v886
    %v958 = vunpack.c.l.b16 %v887
    %v959 = vunpack.c.l.b16 %v888
    %v960 = vunpack.c.l.b16 %v889
    %v961 = vunpack.c.l.b16 %v890
    %v962 = vunpack.c.l.b16 %v891
    %v963 = vunpack.c.l.b16 %v892
    %v964 = vunpack.c.l.b16 %v893
    %v965 = vunpack.c.l.b16 %v894
    %v966 = vunpack.c.l.b16 %v895
    %v967 = vunpack.c.l.b16 %v896
    %v968 = vunpack.c.l.b16 %v897
    %v969 = vunpack.c.l.b16 %v898
    %v970 = vunpack.c.l.b16 %v899
    %v971 = vunpack.c.l.b16 %v900
    %v972 = vunpack.c.l.b16 %v901
    %v973 = vpack.c.b16 %v958, %v957
    %v974 = vpack.c.b16 %v960, %v959
    %v975 = vpack.c.b16 %v962, %v961
    %v976 = vpack.c.b16 %v964, %v963
    %v977 = vpack.c.b16 %v966, %v965
    %v978 = vpack.c.b16 %v968, %v967
    %v979 = vpack.c.b16 %v970, %v969
    %v980 = vpack.c.b16 %v972, %v971
    %989 = vmatprep.subr.bf16.mxu0 0
    %990 = vmatpush1.bf16.msra.mxu0 %v973
    %991 = vmatprep.subr.bf16.mxu0 0
    %992 = vmatpush1.bf16.msra.mxu0 %v974
    %993 = vmatprep.subr.bf16.mxu0 0
    %994 = vmatpush1.bf16.msra.mxu0 %v975
    %995 = vmatprep.subr.bf16.mxu0 0
    %996 = vmatpush1.bf16.msra.mxu0 %v976
    %997 = vmatprep.subr.bf16.mxu0 0
    %998 = vmatpush1.bf16.msra.mxu0 %v977
    %999 = vmatprep.subr.bf16.mxu0 0
    %1000 = vmatpush1.bf16.msra.mxu0 %v978
    %1001 = vmatprep.subr.bf16.mxu0 0
    %1002 = vmatpush1.bf16.msra.mxu0 %v979
    %1003 = vmatprep.subr.bf16.mxu0 0
    %1004 = vmatpush1.bf16.msra.mxu0 %v980
    %1005 = vmatprep.subr.bf16.mxu0 0
    %1006 = vmatpush1.bf16.msra.mxu0 0
    %1007 = vmatprep.subr.bf16.mxu0 0
    %1008 = vmatpush1.bf16.msra.mxu0 0
    %1009 = vmatprep.subr.bf16.mxu0 0
    %1010 = vmatpush1.bf16.msra.mxu0 0
    %1011 = vmatprep.subr.bf16.mxu0 0
    %1012 = vmatpush1.bf16.msra.mxu0 0
    %1013 = vmatprep.subr.bf16.mxu0 0
    %1014 = vmatpush1.bf16.msra.mxu0 0
    %1015 = vmatprep.subr.bf16.mxu0 0
    %1016 = vmatpush1.bf16.msra.mxu0 0
    %1017 = vmatprep.subr.bf16.mxu0 0
    %1018 = vmatpush1.bf16.msra.mxu0 0
    %1019 = vmatprep.subr.bf16.mxu0 0
    %1020 = vmatpush1.bf16.msra.mxu0 0
    %1021 = vmatprep.mubr.bf16.mxu0 0
    %1022 = vmatmul.mubr.bf16.gmra.mrb[0].mxu0 %v939
    %v1023 = vpop.f32.mrb[0].mxu0
    %v1024 = vadd.f32 %v907, %v1023
    %v1025 = vpop.f32.mrb[0].mxu0
    %v1026 = vpop.f32.mrb[0].mxu0
    %v1027 = vpop.f32.mrb[0].mxu0
    %1028 = vdwg.mxu0
    %1029 = vst [vmem:[#allocation11] sm:$0xff] %v1024
    // Predicated region
    $region54: #{tpu_custom_call.1} parent=1 // pred_check
      _
    $region55: #{tpu_custom_call.1} parent=1 // pred_check_branch
      %1031 = sbr.rel (0) target = $region57
    $region56: #{tpu_custom_call.1} parent=1 // pred_region
      %s1033 = ssub.s32 128, 128
      %1034 = vsyncadd [#allocation4], %s1033
      %s1036 = sshll.u32 [#allocation11], 4
      %s1037 = int_to_ptr.vmem [resolvable:$true] %s1036
      %1039 = dma.vmem_to_hbm [thread:$0]  %s1037, 128, %s8, [#allocation4]
    $region57: #{tpu_custom_call.1} parent=1 // pred_fallthru
      _
    // Predicated region
    $region58: #{tpu_custom_call.1} parent=1 // pred_check
      _
    $region59: #{tpu_custom_call.1} parent=1 // pred_check_branch
      %1041 = sbr.rel (0) target = $region61
    $region60: #{tpu_custom_call.1} parent=1 // pred_region
      %1042 = dma.done [#allocation4], 128
    $region61: #{tpu_custom_call.1} parent=1 // pred_fallthru
      _
    %1043 = vsyncpa [#allocation3], 1
    %1044 = vsyncpa [#allocation6], 1
    %1045 = vsyncpa [#allocation9], 1
    %1046 = vsyncpa [#allocation4], 1

// kernel: tpu_custom_call.1
$region0: #{tpu_custom_call.1}
  #allocation0 [shape = 'u32[]', space=smem, size = 0x4, offset = 0x4, fixed_abs, tag = 'smem constant byte address 0x4 - core index']
  #allocation1 [shape = 'u32[144,128]{1,0:T(1,128)}', space=vmem, size = 0x12000, scoped, tag = 'internal scratch']
  %s0 = inlined_call_operand.hbm [shape: bf16[8,64,128], index: 0, kind: input, shape index: {}]
  %s1 = inlined_call_operand.hbm [shape: bf16[128,128], index: 1, kind: input, shape index: {}]
  %s2 = inlined_call_operand.hbm [shape: bf16[128,128], index: 2, kind: input, shape index: {}]
  %s3 = inlined_call_operand.vmem [shape: f32[1,128], index: 3, kind: input, shape index: {}]
  %s4 = inlined_call_operand.hbm [shape: bf16[128,128], index: 4, kind: input, shape index: {}]
  %s5 = inlined_call_operand.vmem [shape: f32[1,128], index: 5, kind: input, shape index: {}]
  %s6 = inlined_call_operand.hbm [shape: bf16[128,128], index: 6, kind: input, shape index: {}]
  %s7 = inlined_call_operand.vmem [shape: f32[1,128], index: 7, kind: input, shape index: {}]
  %s8 = inlined_call_operand.hbm [shape: f32[8,128], index: 8, kind: output, shape index: {}]
  %s9 = sld [smem:[#allocation0]]
  $region62: #{tpu_custom_call.1} parent=0
    _
  %s11 = ssub.s32 1, %s9
  %s12 = scalar_select 0, %s11, %s9
  $region1: #{tpu_custom_call.1} parent=0
    #allocation2 [shape = 'u8[131072]{0}', space=vmem, size = 0x20000, scoped, tag = 'input window, operand 0, single buffered']
    #allocation3 [shape = 's32[1]{0}', space=sflag, size = 0x4, scoped, tag = 'scoped memory for tpu_custom_call.1']
    #allocation4 [shape = 's32[1]{0}', space=sflag, size = 0x4, scoped, tag = 'scoped memory for tpu_custom_call.1']
    #allocation5 [shape = 'u8[32768]{0}', space=vmem, size = 0x8000, scoped, tag = 'input window, operand 1, single buffered']
    #allocation6 [shape = 's32[1]{0}', space=sflag, size = 0x4, scoped, tag = 'scoped memory for tpu_custom_call.1']
    #allocation7 [shape = 'u8[32768]{0}', space=vmem, size = 0x8000, scoped, tag = 'input window, operand 2, single buffered']
    #allocation8 [shape = 'u8[32768]{0}', space=vmem, size = 0x8000, scoped, tag = 'input window, operand 4, single buffered']
    #allocation9 [shape = 's32[1]{0}', space=sflag, size = 0x4, scoped, tag = 'scoped memory for tpu_custom_call.1']
    #allocation10 [shape = 'u8[32768]{0}', space=vmem, size = 0x8000, scoped, tag = 'input window, operand 6, single buffered']
    #allocation11 [shape = 'u8[4096]{0}', space=vmem, size = 0x1000, scoped, tag = 'output window, operand 0, single buffered']
    %13 = vsyncpa [#allocation3], 0
    %14 = vsyncpa [#allocation6], 0
    %15 = vsyncpa [#allocation9], 0
    %16 = vsyncpa [#allocation4], 0
    // Predicated region
    $region2: #{tpu_custom_call.1} parent=1 // pred_check
      _
    $region3: #{tpu_custom_call.1} parent=1 // pred_check_branch
      %18 = sbr.rel (0) target = $region5
    $region4: #{tpu_custom_call.1} parent=1 // pred_region
      %s20 = ssub.s32 4096, 4096
      %21 = vsyncadd [#allocation3], %s20
      %s22 = sshll.u32 [#allocation2], 4
      %s23 = int_to_ptr.vmem [resolvable:$true] %s22
      %28 = dma.hbm_to_vmem [thread:$0]  %s0, 4096, %s23, [#allocation3], 64, 64, 4
    $region5: #{tpu_custom_call.1} parent=1 // pred_fallthru
      _
    // Predicated region
    $region6: #{tpu_custom_call.1} parent=1 // pred_check
      _
    $region7: #{tpu_custom_call.1} parent=1 // pred_check_branch
      %30 = sbr.rel (0) target = $region9
    $region8: #{tpu_custom_call.1} parent=1 // pred_region
      %s32 = ssub.s32 1024, 1024
      %33 = vsyncadd [#allocation6], %s32
      %s34 = sshll.u32 [#allocation5], 4
      %s35 = int_to_ptr.vmem [resolvable:$true] %s34
      %40 = dma.hbm_to_vmem [thread:$0]  %s1, 1024, %s35, [#allocation6], 64, 64, 4
    $region9: #{tpu_custom_call.1} parent=1 // pred_fallthru
      _
    // Predicated region
    $region10: #{tpu_custom_call.1} parent=1 // pred_check
      _
    $region11: #{tpu_custom_call.1} parent=1 // pred_check_branch
      %42 = sbr.rel (0) target = $region13
    $region12: #{tpu_custom_call.1} parent=1 // pred_region
      %s44 = ssub.s32 1024, 1024
      %45 = vsyncadd [#allocation6], %s44
      %s46 = sshll.u32 [#allocation7], 4
      %s47 = int_to_ptr.vmem [resolvable:$true] %s46
      %52 = dma.hbm_to_vmem [thread:$0]  %s2, 1024, %s47, [#allocation6], 64, 64, 4
    $region13: #{tpu_custom_call.1} parent=1 // pred_fallthru
      _
    // Predicated region
    $region14: #{tpu_custom_call.1} parent=1 // pred_check
      _
    $region15: #{tpu_custom_call.1} parent=1 // pred_check_branch
      %54 = sbr.rel (0) target = $region17
    $region16: #{tpu_custom_call.1} parent=1 // pred_region
      _
    $region17: #{tpu_custom_call.1} parent=1 // pred_fallthru
      _
    // Predicated region
    $region18: #{tpu_custom_call.1} parent=1 // pred_check
      _
    $region19: #{tpu_custom_call.1} parent=1 // pred_check_branch
      %56 = sbr.rel (0) target = $region21
    $region20: #{tpu_custom_call.1} parent=1 // pred_region
      %s58 = ssub.s32 1024, 1024
      %59 = vsyncadd [#allocation9], %s58
      %s60 = sshll.u32 [#allocation8], 4
      %s61 = int_to_ptr.vmem [resolvable:$true] %s60
      %66 = dma.hbm_to_vmem [thread:$0]  %s4, 1024, %s61, [#allocation9], 64, 64, 4
    $region21: #{tpu_custom_call.1} parent=1 // pred_fallthru
      _
    // Predicated region
    $region22: #{tpu_custom_call.1} parent=1 // pred_check
      _
    $region23: #{tpu_custom_call.1} parent=1 // pred_check_branch
      %68 = sbr.rel (0) target = $region25
    $region24: #{tpu_custom_call.1} parent=1 // pred_region
      _
    $region25: #{tpu_custom_call.1} parent=1 // pred_fallthru
      _
    // Predicated region
    $region26: #{tpu_custom_call.1} parent=1 // pred_check
      _
    $region27: #{tpu_custom_call.1} parent=1 // pred_check_branch
      %70 = sbr.rel (0) target = $region29
    $region28: #{tpu_custom_call.1} parent=1 // pred_region
      %s72 = ssub.s32 1024, 1024
      %73 = vsyncadd [#allocation9], %s72
      %s74 = sshll.u32 [#allocation10], 4
      %s75 = int_to_ptr.vmem [resolvable:$true] %s74
      %80 = dma.hbm_to_vmem [thread:$0]  %s6, 1024, %s75, [#allocation9], 64, 64, 4
    $region29: #{tpu_custom_call.1} parent=1 // pred_fallthru
      _
    // Predicated region
    $region30: #{tpu_custom_call.1} parent=1 // pred_check
      _
    $region31: #{tpu_custom_call.1} parent=1 // pred_check_branch
      %82 = sbr.rel (0) target = $region33
    $region32: #{tpu_custom_call.1} parent=1 // pred_region
      _
    $region33: #{tpu_custom_call.1} parent=1 // pred_fallthru
      _
    // Predicated region
    $region34: #{tpu_custom_call.1} parent=1 // pred_check
      _
    $region35: #{tpu_custom_call.1} parent=1 // pred_check_branch
      %84 = sbr.rel (0) target = $region37
    $region36: #{tpu_custom_call.1} parent=1 // pred_region
      %85 = dma.done [#allocation3], 4096
    $region37: #{tpu_custom_call.1} parent=1 // pred_fallthru
      _
    // Predicated region
    $region38: #{tpu_custom_call.1} parent=1 // pred_check
      _
    $region39: #{tpu_custom_call.1} parent=1 // pred_check_branch
      %87 = sbr.rel (0) target = $region41
    $region40: #{tpu_custom_call.1} parent=1 // pred_region
      %88 = dma.done [#allocation6], 1024
    $region41: #{tpu_custom_call.1} parent=1 // pred_fallthru
      _
    // Predicated region
    $region42: #{tpu_custom_call.1} parent=1 // pred_check
      _
    $region43: #{tpu_custom_call.1} parent=1 // pred_check_branch
      %90 = sbr.rel (0) target = $region45
    $region44: #{tpu_custom_call.1} parent=1 // pred_region
      %91 = dma.done [#allocation6], 1024
    $region45: #{tpu_custom_call.1} parent=1 // pred_fallthru
      _
    // Predicated region
    $region46: #{tpu_custom_call.1} parent=1 // pred_check
      _
    $region47: #{tpu_custom_call.1} parent=1 // pred_check_branch
      %93 = sbr.rel (0) target = $region49
    $region48: #{tpu_custom_call.1} parent=1 // pred_region
      %94 = dma.done [#allocation9], 1024
    $region49: #{tpu_custom_call.1} parent=1 // pred_fallthru
      _
    // Predicated region
    $region50: #{tpu_custom_call.1} parent=1 // pred_check
      _
    $region51: #{tpu_custom_call.1} parent=1 // pred_check_branch
      %96 = sbr.rel (0) target = $region53
    $region52: #{tpu_custom_call.1} parent=1 // pred_region
      %97 = dma.done [#allocation9], 1024
    $region53: #{tpu_custom_call.1} parent=1 // pred_fallthru
      _
    %v99 = vld [vmem:[#allocation2] sm:$0xf]
    %v100 = vld [vmem:[#allocation2 + $0x4] sm:$0xf]
    %v101 = vld [vmem:[#allocation2 + $0x8] sm:$0xf]
    %v102 = vld [vmem:[#allocation2 + $0xc] sm:$0xf]
    %v103 = vld [vmem:[#allocation2 + $0x10] sm:$0xf]
    %v104 = vld [vmem:[#allocation2 + $0x14] sm:$0xf]
    %v105 = vld [vmem:[#allocation2 + $0x18] sm:$0xf]
    %v106 = vld [vmem:[#allocation2 + $0x1c] sm:$0xf]
    %v107 = vld [vmem:[#allocation2 + $0x20] sm:$0xf]
    %v108 = vld [vmem:[#allocation2 + $0x24] sm:$0xf]
    %v109 = vld [vmem:[#allocation2 + $0x28] sm:$0xf]
    %v110 = vld [vmem:[#allocation2 + $0x2c] sm:$0xf]
    %v111 = vld [vmem:[#allocation2 + $0x30] sm:$0xf]
    %v112 = vld [vmem:[#allocation2 + $0x34] sm:$0xf]
    %v113 = vld [vmem:[#allocation2 + $0x38] sm:$0xf]
    %v114 = vld [vmem:[#allocation2 + $0x3c] sm:$0xf]
    %v115 = vld [vmem:[#allocation2 + $0x40] sm:$0xf]
    %v116 = vld [vmem:[#allocation2 + $0x44] sm:$0xf]
    %v117 = vld [vmem:[#allocation2 + $0x48] sm:$0xf]
    %v118 = vld [vmem:[#allocation2 + $0x4c] sm:$0xf]
    %v119 = vld [vmem:[#allocation2 + $0x50] sm:$0xf]
    %v120 = vld [vmem:[#allocation2 + $0x54] sm:$0xf]
    %v121 = vld [vmem:[#allocation2 + $0x58] sm:$0xf]
    %v122 = vld [vmem:[#allocation2 + $0x5c] sm:$0xf]
    %v123 = vld [vmem:[#allocation2 + $0x60] sm:$0xf]
    %v124 = vld [vmem:[#allocation2 + $0x64] sm:$0xf]
    %v125 = vld [vmem:[#allocation2 + $0x68] sm:$0xf]
    %v126 = vld [vmem:[#allocation2 + $0x6c] sm:$0xf]
    %v127 = vld [vmem:[#allocation2 + $0x70] sm:$0xf]
    %v128 = vld [vmem:[#allocation2 + $0x74] sm:$0xf]
    %v129 = vld [vmem:[#allocation2 + $0x78] sm:$0xf]
    %v130 = vld [vmem:[#allocation2 + $0x7c] sm:$0xf]
    %v131 = vld [vmem:[#allocation2 + $0x80] sm:$0xf]
    %v132 = vld [vmem:[#allocation2 + $0x84] sm:$0xf]
    %v133 = vld [vmem:[#allocation2 + $0x88] sm:$0xf]
    %v134 = vld [vmem:[#allocation2 + $0x8c] sm:$0xf]
    %v135 = vld [vmem:[#allocation2 + $0x90] sm:$0xf]
    %v136 = vld [vmem:[#allocation2 + $0x94] sm:$0xf]
    %v137 = vld [vmem:[#allocation2 + $0x98] sm:$0xf]
    %v138 = vld [vmem:[#allocation2 + $0x9c] sm:$0xf]
    %v139 = vld [vmem:[#allocation2 + $0xa0] sm:$0xf]
    %v140 = vld [vmem:[#allocation2 + $0xa4] sm:$0xf]
    %v141 = vld [vmem:[#allocation2 + $0xa8] sm:$0xf]
    %v142 = vld [vmem:[#allocation2 + $0xac] sm:$0xf]
    %v143 = vld [vmem:[#allocation2 + $0xb0] sm:$0xf]
    %v144 = vld [vmem:[#allocation2 + $0xb4] sm:$0xf]
    %v145 = vld [vmem:[#allocation2 + $0xb8] sm:$0xf]
    %v146 = vld [vmem:[#allocation2 + $0xbc] sm:$0xf]
    %v147 = vld [vmem:[#allocation2 + $0xc0] sm:$0xf]
    %v148 = vld [vmem:[#allocation2 + $0xc4] sm:$0xf]
    %v149 = vld [vmem:[#allocation2 + $0xc8] sm:$0xf]
    %v150 = vld [vmem:[#allocation2 + $0xcc] sm:$0xf]
    %v151 = vld [vmem:[#allocation2 + $0xd0] sm:$0xf]
    %v152 = vld [vmem:[#allocation2 + $0xd4] sm:$0xf]
    %v153 = vld [vmem:[#allocation2 + $0xd8] sm:$0xf]
    %v154 = vld [vmem:[#allocation2 + $0xdc] sm:$0xf]
    %v155 = vld [vmem:[#allocation2 + $0xe0] sm:$0xf]
    %v156 = vld [vmem:[#allocation2 + $0xe4] sm:$0xf]
    %v157 = vld [vmem:[#allocation2 + $0xe8] sm:$0xf]
    %v158 = vld [vmem:[#allocation2 + $0xec] sm:$0xf]
    %v159 = vld [vmem:[#allocation2 + $0xf0] sm:$0xf]
    %v160 = vld [vmem:[#allocation2 + $0xf4] sm:$0xf]
    %v161 = vld [vmem:[#allocation2 + $0xf8] sm:$0xf]
    %v162 = vld [vmem:[#allocation2 + $0xfc] sm:$0xf]
    %v163 = vunpack.c.l.bf16 %v99
    %v164 = vunpack.c.l.bf16 %v100
    %v165 = vunpack.c.l.bf16 %v101
    %v166 = vunpack.c.l.bf16 %v102
    %v167 = vunpack.c.l.bf16 %v103
    %v168 = vunpack.c.l.bf16 %v104
    %v169 = vunpack.c.l.bf16 %v105
    %v170 = vunpack.c.l.bf16 %v106
    %v171 = vunpack.c.l.bf16 %v107
    %v172 = vunpack.c.l.bf16 %v108
    %v173 = vunpack.c.l.bf16 %v109
    %v174 = vunpack.c.l.bf16 %v110
    %v175 = vunpack.c.l.bf16 %v111
    %v176 = vunpack.c.l.bf16 %v112
    %v177 = vunpack.c.l.bf16 %v113
    %v178 = vunpack.c.l.bf16 %v114
    %v179 = vunpack.c.l.bf16 %v115
    %v180 = vunpack.c.l.bf16 %v116
    %v181 = vunpack.c.l.bf16 %v117
    %v182 = vunpack.c.l.bf16 %v118
    %v183 = vunpack.c.l.bf16 %v119
    %v184 = vunpack.c.l.bf16 %v120
    %v185 = vunpack.c.l.bf16 %v121
    %v186 = vunpack.c.l.bf16 %v122
    %v187 = vunpack.c.l.bf16 %v123
    %v188 = vunpack.c.l.bf16 %v124
    %v189 = vunpack.c.l.bf16 %v125
    %v190 = vunpack.c.l.bf16 %v126
    %v191 = vunpack.c.l.bf16 %v127
    %v192 = vunpack.c.l.bf16 %v128
    %v193 = vunpack.c.l.bf16 %v129
    %v194 = vunpack.c.l.bf16 %v130
    %v195 = vunpack.c.l.bf16 %v131
    %v196 = vunpack.c.l.bf16 %v132
    %v197 = vunpack.c.l.bf16 %v133
    %v198 = vunpack.c.l.bf16 %v134
    %v199 = vunpack.c.l.bf16 %v135
    %v200 = vunpack.c.l.bf16 %v136
    %v201 = vunpack.c.l.bf16 %v137
    %v202 = vunpack.c.l.bf16 %v138
    %v203 = vunpack.c.l.bf16 %v139
    %v204 = vunpack.c.l.bf16 %v140
    %v205 = vunpack.c.l.bf16 %v141
    %v206 = vunpack.c.l.bf16 %v142
    %v207 = vunpack.c.l.bf16 %v143
    %v208 = vunpack.c.l.bf16 %v144
    %v209 = vunpack.c.l.bf16 %v145
    %v210 = vunpack.c.l.bf16 %v146
    %v211 = vunpack.c.l.bf16 %v147
    %v212 = vunpack.c.l.bf16 %v148
    %v213 = vunpack.c.l.bf16 %v149
    %v214 = vunpack.c.l.bf16 %v150
    %v215 = vunpack.c.l.bf16 %v151
    %v216 = vunpack.c.l.bf16 %v152
    %v217 = vunpack.c.l.bf16 %v153
    %v218 = vunpack.c.l.bf16 %v154
    %v219 = vunpack.c.l.bf16 %v155
    %v220 = vunpack.c.l.bf16 %v156
    %v221 = vunpack.c.l.bf16 %v157
    %v222 = vunpack.c.l.bf16 %v158
    %v223 = vunpack.c.l.bf16 %v159
    %v224 = vunpack.c.l.bf16 %v160
    %v225 = vunpack.c.l.bf16 %v161
    %v226 = vunpack.c.l.bf16 %v162
    %v227 = vadd.f32 %v163, %v164
    %v228 = vadd.f32 %v227, %v165
    %v229 = vadd.f32 %v228, %v166
    %v230 = vadd.f32 %v229, %v167
    %v231 = vadd.f32 %v230, %v168
    %v232 = vadd.f32 %v231, %v169
    %v233 = vadd.f32 %v232, %v170
    %v234 = vrot.slane %v233, 4
    %v235 = vadd.f32 %v233, %v234
    %v236 = vrot.slane %v235, 2
    %v237 = vadd.f32 %v235, %v236
    %v238 = vrot.slane %v237, 1
    %v239 = vadd.f32 %v237, %v238
    %v240 = vadd.f32 %v171, %v172
    %v241 = vadd.f32 %v240, %v173
    %v242 = vadd.f32 %v241, %v174
    %v243 = vadd.f32 %v242, %v175
    %v244 = vadd.f32 %v243, %v176
    %v245 = vadd.f32 %v244, %v177
    %v246 = vadd.f32 %v245, %v178
    %v247 = vrot.slane %v246, 4
    %v248 = vadd.f32 %v246, %v247
    %v249 = vrot.slane %v248, 2
    %v250 = vadd.f32 %v248, %v249
    %v251 = vrot.slane %v250, 1
    %v252 = vadd.f32 %v250, %v251
    %v253 = vadd.f32 %v179, %v180
    %v254 = vadd.f32 %v253, %v181
    %v255 = vadd.f32 %v254, %v182
    %v256 = vadd.f32 %v255, %v183
    %v257 = vadd.f32 %v256, %v184
    %v258 = vadd.f32 %v257, %v185
    %v259 = vadd.f32 %v258, %v186
    %v260 = vrot.slane %v259, 4
    %v261 = vadd.f32 %v259, %v260
    %v262 = vrot.slane %v261, 2
    %v263 = vadd.f32 %v261, %v262
    %v264 = vrot.slane %v263, 1
    %v265 = vadd.f32 %v263, %v264
    %v266 = vadd.f32 %v187, %v188
    %v267 = vadd.f32 %v266, %v189
    %v268 = vadd.f32 %v267, %v190
    %v269 = vadd.f32 %v268, %v191
    %v270 = vadd.f32 %v269, %v192
    %v271 = vadd.f32 %v270, %v193
    %v272 = vadd.f32 %v271, %v194
    %v273 = vrot.slane %v272, 4
    %v274 = vadd.f32 %v272, %v273
    %v275 = vrot.slane %v274, 2
    %v276 = vadd.f32 %v274, %v275
    %v277 = vrot.slane %v276, 1
    %v278 = vadd.f32 %v276, %v277
    %v279 = vadd.f32 %v195, %v196
    %v280 = vadd.f32 %v279, %v197
    %v281 = vadd.f32 %v280, %v198
    %v282 = vadd.f32 %v281, %v199
    %v283 = vadd.f32 %v282, %v200
    %v284 = vadd.f32 %v283, %v201
    %v285 = vadd.f32 %v284, %v202
    %v286 = vrot.slane %v285, 4
    %v287 = vadd.f32 %v285, %v286
    %v288 = vrot.slane %v287, 2
    %v289 = vadd.f32 %v287, %v288
    %v290 = vrot.slane %v289, 1
    %v291 = vadd.f32 %v289, %v290
    %v292 = vadd.f32 %v203, %v204
    %v293 = vadd.f32 %v292, %v205
    %v294 = vadd.f32 %v293, %v206
    %v295 = vadd.f32 %v294, %v207
    %v296 = vadd.f32 %v295, %v208
    %v297 = vadd.f32 %v296, %v209
    %v298 = vadd.f32 %v297, %v210
    %v299 = vrot.slane %v298, 4
    %v300 = vadd.f32 %v298, %v299
    %v301 = vrot.slane %v300, 2
    %v302 = vadd.f32 %v300, %v301
    %v303 = vrot.slane %v302, 1
    %v304 = vadd.f32 %v302, %v303
    %v305 = vadd.f32 %v211, %v212
    %v306 = vadd.f32 %v305, %v213
    %v307 = vadd.f32 %v306, %v214
    %v308 = vadd.f32 %v307, %v215
    %v309 = vadd.f32 %v308, %v216
    %v310 = vadd.f32 %v309, %v217
    %v311 = vadd.f32 %v310, %v218
    %v312 = vrot.slane %v311, 4
    %v313 = vadd.f32 %v311, %v312
    %v314 = vrot.slane %v313, 2
    %v315 = vadd.f32 %v313, %v314
    %v316 = vrot.slane %v315, 1
    %v317 = vadd.f32 %v315, %v316
    %v318 = vadd.f32 %v219, %v220
    %v319 = vadd.f32 %v318, %v221
    %v320 = vadd.f32 %v319, %v222
    %v321 = vadd.f32 %v320, %v223
    %v322 = vadd.f32 %v321, %v224
    %v323 = vadd.f32 %v322, %v225
    %v324 = vadd.f32 %v323, %v226
    %v325 = vrot.slane %v324, 4
    %v326 = vadd.f32 %v324, %v325
    %v327 = vrot.slane %v326, 2
    %v328 = vadd.f32 %v326, %v327
    %v329 = vrot.slane %v328, 1
    %v330 = vadd.f32 %v328, %v329
    %v331 = vmul.f32 %v239, 0.015625
    %v332 = vmul.f32 %v252, 0.015625
    %v333 = vmul.f32 %v265, 0.015625
    %v334 = vmul.f32 %v278, 0.015625
    %v335 = vmul.f32 %v291, 0.015625
    %v336 = vmul.f32 %v304, 0.015625
    %v337 = vmul.f32 %v317, 0.015625
    %v338 = vmul.f32 %v330, 0.015625
    %v339 = vmax.f32 %v163, %v164
    %v340 = vmax.f32 %v339, %v165
    %v341 = vmax.f32 %v340, %v166
    %v342 = vmax.f32 %v341, %v167
    %v343 = vmax.f32 %v342, %v168
    %v344 = vmax.f32 %v343, %v169
    %v345 = vmax.f32 %v344, %v170
    %v346 = vrot.slane %v345, 4
    %v347 = vmax.f32 %v345, %v346
    %v348 = vrot.slane %v347, 2
    %v349 = vmax.f32 %v347, %v348
    %v350 = vrot.slane %v349, 1
    %v351 = vmax.f32 %v349, %v350
    %v352 = vmax.f32 %v171, %v172
    %v353 = vmax.f32 %v352, %v173
    %v354 = vmax.f32 %v353, %v174
    %v355 = vmax.f32 %v354, %v175
    %v356 = vmax.f32 %v355, %v176
    %v357 = vmax.f32 %v356, %v177
    %v358 = vmax.f32 %v357, %v178
    %v359 = vrot.slane %v358, 4
    %v360 = vmax.f32 %v358, %v359
    %v361 = vrot.slane %v360, 2
    %v362 = vmax.f32 %v360, %v361
    %v363 = vrot.slane %v362, 1
    %v364 = vmax.f32 %v362, %v363
    %v365 = vmax.f32 %v179, %v180
    %v366 = vmax.f32 %v365, %v181
    %v367 = vmax.f32 %v366, %v182
    %v368 = vmax.f32 %v367, %v183
    %v369 = vmax.f32 %v368, %v184
    %v370 = vmax.f32 %v369, %v185
    %v371 = vmax.f32 %v370, %v186
    %v372 = vrot.slane %v371, 4
    %v373 = vmax.f32 %v371, %v372
    %v374 = vrot.slane %v373, 2
    %v375 = vmax.f32 %v373, %v374
    %v376 = vrot.slane %v375, 1
    %v377 = vmax.f32 %v375, %v376
    %v378 = vmax.f32 %v187, %v188
    %v379 = vmax.f32 %v378, %v189
    %v380 = vmax.f32 %v379, %v190
    %v381 = vmax.f32 %v380, %v191
    %v382 = vmax.f32 %v381, %v192
    %v383 = vmax.f32 %v382, %v193
    %v384 = vmax.f32 %v383, %v194
    %v385 = vrot.slane %v384, 4
    %v386 = vmax.f32 %v384, %v385
    %v387 = vrot.slane %v386, 2
    %v388 = vmax.f32 %v386, %v387
    %v389 = vrot.slane %v388, 1
    %v390 = vmax.f32 %v388, %v389
    %v391 = vmax.f32 %v195, %v196
    %v392 = vmax.f32 %v391, %v197
    %v393 = vmax.f32 %v392, %v198
    %v394 = vmax.f32 %v393, %v199
    %v395 = vmax.f32 %v394, %v200
    %v396 = vmax.f32 %v395, %v201
    %v397 = vmax.f32 %v396, %v202
    %v398 = vrot.slane %v397, 4
    %v399 = vmax.f32 %v397, %v398
    %v400 = vrot.slane %v399, 2
    %v401 = vmax.f32 %v399, %v400
    %v402 = vrot.slane %v401, 1
    %v403 = vmax.f32 %v401, %v402
    %v404 = vmax.f32 %v203, %v204
    %v405 = vmax.f32 %v404, %v205
    %v406 = vmax.f32 %v405, %v206
    %v407 = vmax.f32 %v406, %v207
    %v408 = vmax.f32 %v407, %v208
    %v409 = vmax.f32 %v408, %v209
    %v410 = vmax.f32 %v409, %v210
    %v411 = vrot.slane %v410, 4
    %v412 = vmax.f32 %v410, %v411
    %v413 = vrot.slane %v412, 2
    %v414 = vmax.f32 %v412, %v413
    %v415 = vrot.slane %v414, 1
    %v416 = vmax.f32 %v414, %v415
    %v417 = vmax.f32 %v211, %v212
    %v418 = vmax.f32 %v417, %v213
    %v419 = vmax.f32 %v418, %v214
    %v420 = vmax.f32 %v419, %v215
    %v421 = vmax.f32 %v420, %v216
    %v422 = vmax.f32 %v421, %v217
    %v423 = vmax.f32 %v422, %v218
    %v424 = vrot.slane %v423, 4
    %v425 = vmax.f32 %v423, %v424
    %v426 = vrot.slane %v425, 2
    %v427 = vmax.f32 %v425, %v426
    %v428 = vrot.slane %v427, 1
    %v429 = vmax.f32 %v427, %v428
    %v430 = vmax.f32 %v219, %v220
    %v431 = vmax.f32 %v430, %v221
    %v432 = vmax.f32 %v431, %v222
    %v433 = vmax.f32 %v432, %v223
    %v434 = vmax.f32 %v433, %v224
    %v435 = vmax.f32 %v434, %v225
    %v436 = vmax.f32 %v435, %v226
    %v437 = vrot.slane %v436, 4
    %v438 = vmax.f32 %v436, %v437
    %v439 = vrot.slane %v438, 2
    %v440 = vmax.f32 %v438, %v439
    %v441 = vrot.slane %v440, 1
    %v442 = vmax.f32 %v440, %v441
    %v443 = vpack.c.bf16 %v331, %v331
    %v444 = vpack.c.bf16 %v332, %v332
    %v445 = vpack.c.bf16 %v333, %v333
    %v446 = vpack.c.bf16 %v334, %v334
    %v447 = vpack.c.bf16 %v335, %v335
    %v448 = vpack.c.bf16 %v336, %v336
    %v449 = vpack.c.bf16 %v337, %v337
    %v450 = vpack.c.bf16 %v338, %v338
    %v451 = vld [vmem:[#allocation7] sm:$0xf]
    %v452 = vld [vmem:[#allocation7 + $0x4] sm:$0xf]
    %v453 = vld [vmem:[#allocation7 + $0x8] sm:$0xf]
    %v454 = vld [vmem:[#allocation7 + $0xc] sm:$0xf]
    %v455 = vld [vmem:[#allocation7 + $0x10] sm:$0xf]
    %v456 = vld [vmem:[#allocation7 + $0x14] sm:$0xf]
    %v457 = vld [vmem:[#allocation7 + $0x18] sm:$0xf]
    %v458 = vld [vmem:[#allocation7 + $0x1c] sm:$0xf]
    %v459 = vld [vmem:[#allocation7 + $0x20] sm:$0xf]
    %v460 = vld [vmem:[#allocation7 + $0x24] sm:$0xf]
    %v461 = vld [vmem:[#allocation7 + $0x28] sm:$0xf]
    %v462 = vld [vmem:[#allocation7 + $0x2c] sm:$0xf]
    %v463 = vld [vmem:[#allocation7 + $0x30] sm:$0xf]
    %v464 = vld [vmem:[#allocation7 + $0x34] sm:$0xf]
    %v465 = vld [vmem:[#allocation7 + $0x38] sm:$0xf]
    %v466 = vld [vmem:[#allocation7 + $0x3c] sm:$0xf]
    %v467 = vld [vmem:[%s3] sm:$0x1]
    %v469 = vlaneseq
    %v470 = vshrl.u32 %v469, 7
    %v471 = vsub.s32 0, %v470
    %v472 = vrot.slane %v467, %v471
    %v482 = vunpack.c.l.b16 %v443
    %v483 = vunpack.c.l.b16 %v444
    %v484 = vunpack.c.l.b16 %v445
    %v485 = vunpack.c.l.b16 %v446
    %v486 = vunpack.c.l.b16 %v447
    %v487 = vunpack.c.l.b16 %v448
    %v488 = vunpack.c.l.b16 %v449
    %v489 = vunpack.c.l.b16 %v450
    %vm490 = vcmask 1041409
    %v491 = vsel %vm490, %v483, %v482
    %vm492 = vcmask 1042434
    %v493 = vsel %vm492, %v484, %v491
    %vm494 = vcmask 1043459
    %v495 = vsel %vm494, %v485, %v493
    %vm496 = vcmask 1044484
    %v497 = vsel %vm496, %v486, %v495
    %vm498 = vcmask 1045509
    %v499 = vsel %vm498, %v487, %v497
    %vm500 = vcmask 1046534
    %v501 = vsel %vm500, %v488, %v499
    %vm502 = vcmask 1047559
    %v503 = vsel %vm502, %v489, %v501
    %v504 = vpack.c.b16 %v503, %v503
    %v522 = vunpack.c.l.b16 %v451
    %v523 = vunpack.c.l.b16 %v452
    %v524 = vunpack.c.l.b16 %v453
    %v525 = vunpack.c.l.b16 %v454
    %v526 = vunpack.c.l.b16 %v455
    %v527 = vunpack.c.l.b16 %v456
    %v528 = vunpack.c.l.b16 %v457
    %v529 = vunpack.c.l.b16 %v458
    %v530 = vunpack.c.l.b16 %v459
    %v531 = vunpack.c.l.b16 %v460
    %v532 = vunpack.c.l.b16 %v461
    %v533 = vunpack.c.l.b16 %v462
    %v534 = vunpack.c.l.b16 %v463
    %v535 = vunpack.c.l.b16 %v464
    %v536 = vunpack.c.l.b16 %v465
    %v537 = vunpack.c.l.b16 %v466
    %v538 = vpack.c.b16 %v523, %v522
    %v539 = vpack.c.b16 %v525, %v524
    %v540 = vpack.c.b16 %v527, %v526
    %v541 = vpack.c.b16 %v529, %v528
    %v542 = vpack.c.b16 %v531, %v530
    %v543 = vpack.c.b16 %v533, %v532
    %v544 = vpack.c.b16 %v535, %v534
    %v545 = vpack.c.b16 %v537, %v536
    %554 = vmatprep.subr.bf16.mxu0 0
    %555 = vmatpush1.bf16.msra.mxu0 %v538
    %556 = vmatprep.subr.bf16.mxu0 0
    %557 = vmatpush1.bf16.msra.mxu0 %v539
    %558 = vmatprep.subr.bf16.mxu0 0
    %559 = vmatpush1.bf16.msra.mxu0 %v540
    %560 = vmatprep.subr.bf16.mxu0 0
    %561 = vmatpush1.bf16.msra.mxu0 %v541
    %562 = vmatprep.subr.bf16.mxu0 0
    %563 = vmatpush1.bf16.msra.mxu0 %v542
    %564 = vmatprep.subr.bf16.mxu0 0
    %565 = vmatpush1.bf16.msra.mxu0 %v543
    %566 = vmatprep.subr.bf16.mxu0 0
    %567 = vmatpush1.bf16.msra.mxu0 %v544
    %568 = vmatprep.subr.bf16.mxu0 0
    %569 = vmatpush1.bf16.msra.mxu0 %v545
    %570 = vmatprep.subr.bf16.mxu0 0
    %571 = vmatpush1.bf16.msra.mxu0 0
    %572 = vmatprep.subr.bf16.mxu0 0
    %573 = vmatpush1.bf16.msra.mxu0 0
    %574 = vmatprep.subr.bf16.mxu0 0
    %575 = vmatpush1.bf16.msra.mxu0 0
    %576 = vmatprep.subr.bf16.mxu0 0
    %577 = vmatpush1.bf16.msra.mxu0 0
    %578 = vmatprep.subr.bf16.mxu0 0
    %579 = vmatpush1.bf16.msra.mxu0 0
    %580 = vmatprep.subr.bf16.mxu0 0
    %581 = vmatpush1.bf16.msra.mxu0 0
    %582 = vmatprep.subr.bf16.mxu0 0
    %583 = vmatpush1.bf16.msra.mxu0 0
    %584 = vmatprep.subr.bf16.mxu0 0
    %585 = vmatpush1.bf16.msra.mxu0 0
    %586 = vmatprep.mubr.bf16.mxu0 0
    %587 = vmatmul.mubr.bf16.gmra.mrb[0].mxu0 %v504
    %v588 = vpop.f32.mrb[0].mxu0
    %v589 = vadd.f32 %v472, %v588
    %v590 = vpop.f32.mrb[0].mxu0
    %v591 = vpop.f32.mrb[0].mxu0
    %v592 = vpop.f32.mrb[0].mxu0
    %593 = vdwg.mxu0
    %594 = vmax.xlane.f32.xlu0 %v589
    %v595 = vpop.xlane.xlu0 %594
    %v596 = vsub.f32 %v589, %v595
    %v597 = vmul.f32 %v596, 1.442695
    %v598 = vpow.pop %v597
    %599 = vadd.xlane.f32.xlu0 %v598
    %v600 = vpop.xlane.xlu0 %599
    %v601 = vrcp.pop %v600
    %v602 = vmul.f32 %v598, %v601
    %v603 = vpack.c.bf16 %v602, %v602
    %v604 = vld [vmem:[#allocation5] sm:$0xf]
    %v605 = vld [vmem:[#allocation5 + $0x4] sm:$0xf]
    %v606 = vld [vmem:[#allocation5 + $0x8] sm:$0xf]
    %v607 = vld [vmem:[#allocation5 + $0xc] sm:$0xf]
    %v608 = vld [vmem:[#allocation5 + $0x10] sm:$0xf]
    %v609 = vld [vmem:[#allocation5 + $0x14] sm:$0xf]
    %v610 = vld [vmem:[#allocation5 + $0x18] sm:$0xf]
    %v611 = vld [vmem:[#allocation5 + $0x1c] sm:$0xf]
    %v612 = vld [vmem:[#allocation5 + $0x20] sm:$0xf]
    %v613 = vld [vmem:[#allocation5 + $0x24] sm:$0xf]
    %v614 = vld [vmem:[#allocation5 + $0x28] sm:$0xf]
    %v615 = vld [vmem:[#allocation5 + $0x2c] sm:$0xf]
    %v616 = vld [vmem:[#allocation5 + $0x30] sm:$0xf]
    %v617 = vld [vmem:[#allocation5 + $0x34] sm:$0xf]
    %v618 = vld [vmem:[#allocation5 + $0x38] sm:$0xf]
    %v619 = vld [vmem:[#allocation5 + $0x3c] sm:$0xf]
    %v636 = vunpack.c.l.b16 %v604
    %v637 = vunpack.c.l.b16 %v605
    %v638 = vunpack.c.l.b16 %v606
    %v639 = vunpack.c.l.b16 %v607
    %v640 = vunpack.c.l.b16 %v608
    %v641 = vunpack.c.l.b16 %v609
    %v642 = vunpack.c.l.b16 %v610
    %v643 = vunpack.c.l.b16 %v611
    %v644 = vunpack.c.l.b16 %v612
    %v645 = vunpack.c.l.b16 %v613
    %v646 = vunpack.c.l.b16 %v614
    %v647 = vunpack.c.l.b16 %v615
    %v648 = vunpack.c.l.b16 %v616
    %v649 = vunpack.c.l.b16 %v617
    %v650 = vunpack.c.l.b16 %v618
    %v651 = vunpack.c.l.b16 %v619
    %v652 = vpack.c.b16 %v637, %v636
    %v653 = vpack.c.b16 %v639, %v638
    %v654 = vpack.c.b16 %v641, %v640
    %v655 = vpack.c.b16 %v643, %v642
    %v656 = vpack.c.b16 %v645, %v644
    %v657 = vpack.c.b16 %v647, %v646
    %v658 = vpack.c.b16 %v649, %v648
    %v659 = vpack.c.b16 %v651, %v650
    %668 = vmatprep.subr.bf16.mxu0 0
    %669 = vmatpush1.bf16.msra.mxu0 %v652
    %670 = vmatprep.subr.bf16.mxu0 0
    %671 = vmatpush1.bf16.msra.mxu0 %v653
    %672 = vmatprep.subr.bf16.mxu0 0
    %673 = vmatpush1.bf16.msra.mxu0 %v654
    %674 = vmatprep.subr.bf16.mxu0 0
    %675 = vmatpush1.bf16.msra.mxu0 %v655
    %676 = vmatprep.subr.bf16.mxu0 0
    %677 = vmatpush1.bf16.msra.mxu0 %v656
    %678 = vmatprep.subr.bf16.mxu0 0
    %679 = vmatpush1.bf16.msra.mxu0 %v657
    %680 = vmatprep.subr.bf16.mxu0 0
    %681 = vmatpush1.bf16.msra.mxu0 %v658
    %682 = vmatprep.subr.bf16.mxu0 0
    %683 = vmatpush1.bf16.msra.mxu0 %v659
    %684 = vmatprep.subr.bf16.mxu0 0
    %685 = vmatpush1.bf16.msra.mxu0 0
    %686 = vmatprep.subr.bf16.mxu0 0
    %687 = vmatpush1.bf16.msra.mxu0 0
    %688 = vmatprep.subr.bf16.mxu0 0
    %689 = vmatpush1.bf16.msra.mxu0 0
    %690 = vmatprep.subr.bf16.mxu0 0
    %691 = vmatpush1.bf16.msra.mxu0 0
    %692 = vmatprep.subr.bf16.mxu0 0
    %693 = vmatpush1.bf16.msra.mxu0 0
    %694 = vmatprep.subr.bf16.mxu0 0
    %695 = vmatpush1.bf16.msra.mxu0 0
    %696 = vmatprep.subr.bf16.mxu0 0
    %697 = vmatpush1.bf16.msra.mxu0 0
    %698 = vmatprep.subr.bf16.mxu0 0
    %699 = vmatpush1.bf16.msra.mxu0 0
    %700 = vmatprep.mubr.bf16.mxu0 0
    %701 = vmatmul.mubr.bf16.gmra.mrb[0].mxu0 %v603
    %v702 = vpop.f32.mrb[0].mxu0
    %v703 = vadd.f32 0.0, %v702
    %v704 = vpop.f32.mrb[0].mxu0
    %v705 = vpop.f32.mrb[0].mxu0
    %v706 = vpop.f32.mrb[0].mxu0
    %707 = vdwg.mxu0
    %v708 = vpack.c.bf16 %v351, %v351
    %v709 = vpack.c.bf16 %v364, %v364
    %v710 = vpack.c.bf16 %v377, %v377
    %v711 = vpack.c.bf16 %v390, %v390
    %v712 = vpack.c.bf16 %v403, %v403
    %v713 = vpack.c.bf16 %v416, %v416
    %v714 = vpack.c.bf16 %v429, %v429
    %v715 = vpack.c.bf16 %v442, %v442
    %v716 = vld [vmem:[#allocation8] sm:$0xf]
    %v717 = vld [vmem:[#allocation8 + $0x4] sm:$0xf]
    %v718 = vld [vmem:[#allocation8 + $0x8] sm:$0xf]
    %v719 = vld [vmem:[#allocation8 + $0xc] sm:$0xf]
    %v720 = vld [vmem:[#allocation8 + $0x10] sm:$0xf]
    %v721 = vld [vmem:[#allocation8 + $0x14] sm:$0xf]
    %v722 = vld [vmem:[#allocation8 + $0x18] sm:$0xf]
    %v723 = vld [vmem:[#allocation8 + $0x1c] sm:$0xf]
    %v724 = vld [vmem:[#allocation8 + $0x20] sm:$0xf]
    %v725 = vld [vmem:[#allocation8 + $0x24] sm:$0xf]
    %v726 = vld [vmem:[#allocation8 + $0x28] sm:$0xf]
    %v727 = vld [vmem:[#allocation8 + $0x2c] sm:$0xf]
    %v728 = vld [vmem:[#allocation8 + $0x30] sm:$0xf]
    %v729 = vld [vmem:[#allocation8 + $0x34] sm:$0xf]
    %v730 = vld [vmem:[#allocation8 + $0x38] sm:$0xf]
    %v731 = vld [vmem:[#allocation8 + $0x3c] sm:$0xf]
    %v732 = vld [vmem:[%s5] sm:$0x1]
    %v734 = vlaneseq
    %v735 = vshrl.u32 %v734, 7
    %v736 = vsub.s32 0, %v735
    %v737 = vrot.slane %v732, %v736
    %v747 = vunpack.c.l.b16 %v708
    %v748 = vunpack.c.l.b16 %v709
    %v749 = vunpack.c.l.b16 %v710
    %v750 = vunpack.c.l.b16 %v711
    %v751 = vunpack.c.l.b16 %v712
    %v752 = vunpack.c.l.b16 %v713
    %v753 = vunpack.c.l.b16 %v714
    %v754 = vunpack.c.l.b16 %v715
    %v755 = vsel %vm490, %v748, %v747
    %v756 = vsel %vm492, %v749, %v755
    %v757 = vsel %vm494, %v750, %v756
    %v758 = vsel %vm496, %v751, %v757
    %v759 = vsel %vm498, %v752, %v758
    %v760 = vsel %vm500, %v753, %v759
    %v761 = vsel %vm502, %v754, %v760
    %v762 = vpack.c.b16 %v761, %v761
    %v780 = vunpack.c.l.b16 %v716
    %v781 = vunpack.c.l.b16 %v717
    %v782 = vunpack.c.l.b16 %v718
    %v783 = vunpack.c.l.b16 %v719
    %v784 = vunpack.c.l.b16 %v720
    %v785 = vunpack.c.l.b16 %v721
    %v786 = vunpack.c.l.b16 %v722
    %v787 = vunpack.c.l.b16 %v723
    %v788 = vunpack.c.l.b16 %v724
    %v789 = vunpack.c.l.b16 %v725
    %v790 = vunpack.c.l.b16 %v726
    %v791 = vunpack.c.l.b16 %v727
    %v792 = vunpack.c.l.b16 %v728
    %v793 = vunpack.c.l.b16 %v729
    %v794 = vunpack.c.l.b16 %v730
    %v795 = vunpack.c.l.b16 %v731
    %v796 = vpack.c.b16 %v781, %v780
    %v797 = vpack.c.b16 %v783, %v782
    %v798 = vpack.c.b16 %v785, %v784
    %v799 = vpack.c.b16 %v787, %v786
    %v800 = vpack.c.b16 %v789, %v788
    %v801 = vpack.c.b16 %v791, %v790
    %v802 = vpack.c.b16 %v793, %v792
    %v803 = vpack.c.b16 %v795, %v794
    %812 = vmatprep.subr.bf16.mxu0 0
    %813 = vmatpush1.bf16.msra.mxu0 %v796
    %814 = vmatprep.subr.bf16.mxu0 0
    %815 = vmatpush1.bf16.msra.mxu0 %v797
    %816 = vmatprep.subr.bf16.mxu0 0
    %817 = vmatpush1.bf16.msra.mxu0 %v798
    %818 = vmatprep.subr.bf16.mxu0 0
    %819 = vmatpush1.bf16.msra.mxu0 %v799
    %820 = vmatprep.subr.bf16.mxu0 0
    %821 = vmatpush1.bf16.msra.mxu0 %v800
    %822 = vmatprep.subr.bf16.mxu0 0
    %823 = vmatpush1.bf16.msra.mxu0 %v801
    %824 = vmatprep.subr.bf16.mxu0 0
    %825 = vmatpush1.bf16.msra.mxu0 %v802
    %826 = vmatprep.subr.bf16.mxu0 0
    %827 = vmatpush1.bf16.msra.mxu0 %v803
    %828 = vmatprep.subr.bf16.mxu0 0
    %829 = vmatpush1.bf16.msra.mxu0 0
    %830 = vmatprep.subr.bf16.mxu0 0
    %831 = vmatpush1.bf16.msra.mxu0 0
    %832 = vmatprep.subr.bf16.mxu0 0
    %833 = vmatpush1.bf16.msra.mxu0 0
    %834 = vmatprep.subr.bf16.mxu0 0
    %835 = vmatpush1.bf16.msra.mxu0 0
    %836 = vmatprep.subr.bf16.mxu0 0
    %837 = vmatpush1.bf16.msra.mxu0 0
    %838 = vmatprep.subr.bf16.mxu0 0
    %839 = vmatpush1.bf16.msra.mxu0 0
    %840 = vmatprep.subr.bf16.mxu0 0
    %841 = vmatpush1.bf16.msra.mxu0 0
    %842 = vmatprep.subr.bf16.mxu0 0
    %843 = vmatpush1.bf16.msra.mxu0 0
    %844 = vmatprep.mubr.bf16.mxu0 0
    %845 = vmatmul.mubr.bf16.gmra.mrb[0].mxu0 %v762
    %v846 = vpop.f32.mrb[0].mxu0
    %v847 = vadd.f32 %v737, %v846
    %v848 = vpop.f32.mrb[0].mxu0
    %v849 = vpop.f32.mrb[0].mxu0
    %v850 = vpop.f32.mrb[0].mxu0
    %851 = vdwg.mxu0
    %v852 = vtanh.pop %v847
    %v853 = vmul.f32 %v852, %v703
    %v855 = vrot.slane %v853, 1
    %v856 = vrot.slane %v853, 2
    %v857 = vrot.slane %v853, 3
    %v858 = vrot.slane %v853, 4
    %v859 = vrot.slane %v853, 5
    %v860 = vrot.slane %v853, 6
    %v861 = vrot.slane %v853, 7
    %v870 = vsub.f32 %v351, %v853
    %v871 = vsub.f32 %v364, %v855
    %v872 = vsub.f32 %v377, %v856
    %v873 = vsub.f32 %v390, %v857
    %v874 = vsub.f32 %v403, %v858
    %v875 = vsub.f32 %v416, %v859
    %v876 = vsub.f32 %v429, %v860
    %v877 = vsub.f32 %v442, %v861
    %v878 = vpack.c.bf16 %v870, %v870
    %v879 = vpack.c.bf16 %v871, %v871
    %v880 = vpack.c.bf16 %v872, %v872
    %v881 = vpack.c.bf16 %v873, %v873
    %v882 = vpack.c.bf16 %v874, %v874
    %v883 = vpack.c.bf16 %v875, %v875
    %v884 = vpack.c.bf16 %v876, %v876
    %v885 = vpack.c.bf16 %v877, %v877
    %v886 = vld [vmem:[#allocation10] sm:$0xf]
    %v887 = vld [vmem:[#allocation10 + $0x4] sm:$0xf]
    %v888 = vld [vmem:[#allocation10 + $0x8] sm:$0xf]
    %v889 = vld [vmem:[#allocation10 + $0xc] sm:$0xf]
    %v890 = vld [vmem:[#allocation10 + $0x10] sm:$0xf]
    %v891 = vld [vmem:[#allocation10 + $0x14] sm:$0xf]
    %v892 = vld [vmem:[#allocation10 + $0x18] sm:$0xf]
    %v893 = vld [vmem:[#allocation10 + $0x1c] sm:$0xf]
    %v894 = vld [vmem:[#allocation10 + $0x20] sm:$0xf]
    %v895 = vld [vmem:[#allocation10 + $0x24] sm:$0xf]
    %v896 = vld [vmem:[#allocation10 + $0x28] sm:$0xf]
    %v897 = vld [vmem:[#allocation10 + $0x2c] sm:$0xf]
    %v898 = vld [vmem:[#allocation10 + $0x30] sm:$0xf]
    %v899 = vld [vmem:[#allocation10 + $0x34] sm:$0xf]
    %v900 = vld [vmem:[#allocation10 + $0x38] sm:$0xf]
    %v901 = vld [vmem:[#allocation10 + $0x3c] sm:$0xf]
    %v902 = vld [vmem:[%s7] sm:$0x1]
    %v904 = vlaneseq
    %v905 = vshrl.u32 %v904, 7
    %v906 = vsub.s32 0, %v905
    %v907 = vrot.slane %v902, %v906
    %v917 = vunpack.c.l.b16 %v878
    %v918 = vunpack.c.l.b16 %v879
    %v919 = vunpack.c.l.b16 %v880
    %v920 = vunpack.c.l.b16 %v881
    %v921 = vunpack.c.l.b16 %v882
    %v922 = vunpack.c.l.b16 %v883
    %v923 = vunpack.c.l.b16 %v884
    %v924 = vunpack.c.l.b16 %v885
    %v925 = vrot.slane %v918, 7
    %v926 = vsel %vm490, %v925, %v917
    %v927 = vrot.slane %v919, 6
    %v928 = vsel %vm492, %v927, %v926
    %v929 = vrot.slane %v920, 5
    %v930 = vsel %vm494, %v929, %v928
    %v931 = vrot.slane %v921, 4
    %v932 = vsel %vm496, %v931, %v930
    %v933 = vrot.slane %v922, 3
    %v934 = vsel %vm498, %v933, %v932
    %v935 = vrot.slane %v923, 2
    %v936 = vsel %vm500, %v935, %v934
    %v937 = vrot.slane %v924, 1
    %v938 = vsel %vm502, %v937, %v936
    %v939 = vpack.c.b16 %v938, %v938
    %v957 = vunpack.c.l.b16 %v886
    %v958 = vunpack.c.l.b16 %v887
    %v959 = vunpack.c.l.b16 %v888
    %v960 = vunpack.c.l.b16 %v889
    %v961 = vunpack.c.l.b16 %v890
    %v962 = vunpack.c.l.b16 %v891
    %v963 = vunpack.c.l.b16 %v892
    %v964 = vunpack.c.l.b16 %v893
    %v965 = vunpack.c.l.b16 %v894
    %v966 = vunpack.c.l.b16 %v895
    %v967 = vunpack.c.l.b16 %v896
    %v968 = vunpack.c.l.b16 %v897
    %v969 = vunpack.c.l.b16 %v898
    %v970 = vunpack.c.l.b16 %v899
    %v971 = vunpack.c.l.b16 %v900
    %v972 = vunpack.c.l.b16 %v901
    %v973 = vpack.c.b16 %v958, %v957
    %v974 = vpack.c.b16 %v960, %v959
    %v975 = vpack.c.b16 %v962, %v961
    %v976 = vpack.c.b16 %v964, %v963
    %v977 = vpack.c.b16 %v966, %v965
    %v978 = vpack.c.b16 %v968, %v967
    %v979 = vpack.c.b16 %v970, %v969
    %v980 = vpack.c.b16 %v972, %v971
    %989 = vmatprep.subr.bf16.mxu0 0
    %990 = vmatpush1.bf16.msra.mxu0 %v973
    %991 = vmatprep.subr.bf16.mxu0 0
    %992 = vmatpush1.bf16.msra.mxu0 %v974
    %993 = vmatprep.subr.bf16.mxu0 0
    %994 = vmatpush1.bf16.msra.mxu0 %v975
    %995 = vmatprep.subr.bf16.mxu0 0
    %996 = vmatpush1.bf16.msra.mxu0 %v976
    %997 = vmatprep.subr.bf16.mxu0 0
    %998 = vmatpush1.bf16.msra.mxu0 %v977
    %999 = vmatprep.subr.bf16.mxu0 0
    %1000 = vmatpush1.bf16.msra.mxu0 %v978
    %1001 = vmatprep.subr.bf16.mxu0 0
    %1002 = vmatpush1.bf16.msra.mxu0 %v979
    %1003 = vmatprep.subr.bf16.mxu0 0
    %1004 = vmatpush1.bf16.msra.mxu0 %v980
    %1005 = vmatprep.subr.bf16.mxu0 0
    %1006 = vmatpush1.bf16.msra.mxu0 0
    %1007 = vmatprep.subr.bf16.mxu0 0
    %1008 = vmatpush1.bf16.msra.mxu0 0
    %1009 = vmatprep.subr.bf16.mxu0 0
    %1010 = vmatpush1.bf16.msra.mxu0 0
    %1011 = vmatprep.subr.bf16.mxu0 0
    %1012 = vmatpush1.bf16.msra.mxu0 0
    %1013 = vmatprep.subr.bf16.mxu0 0
    %1014 = vmatpush1.bf16.msra.mxu0 0
    %1015 = vmatprep.subr.bf16.mxu0 0
    %1016 = vmatpush1.bf16.msra.mxu0 0
    %1017 = vmatprep.subr.bf16.mxu0 0
    %1018 = vmatpush1.bf16.msra.mxu0 0
    %1019 = vmatprep.subr.bf16.mxu0 0
    %1020 = vmatpush1.bf16.msra.mxu0 0
    %1021 = vmatprep.mubr.bf16.mxu0 0
    %1022 = vmatmul.mubr.bf16.gmra.mrb[0].mxu0 %v939
    %v1023 = vpop.f32.mrb[0].mxu0
    %v1024 = vadd.f32 %v907, %v1023
    %v1025 = vpop.f32.mrb[0].mxu0
    %v1026 = vpop.f32.mrb[0].mxu0
    %v1027 = vpop.f32.mrb[0].mxu0
    %1028 = vdwg.mxu0
    %1029 = vst [vmem:[#allocation11] sm:$0xff] %v1024
    // Predicated region
    $region54: #{tpu_custom_call.1} parent=1 // pred_check
      _
    $region55: #{tpu_custom_call.1} parent=1 // pred_check_branch
      %1031 = sbr.rel (0) target = $region57
    $region56: #{tpu_custom_call.1} parent=1 // pred_region
      %s1033 = ssub.s32 128, 128
      %1034 = vsyncadd [#allocation4], %s1033
      %s1036 = sshll.u32 [#allocation11], 4
      %s1037 = int_to_ptr.vmem [resolvable:$true] %s1036
      %1039 = dma.vmem_to_hbm [thread:$0]  %s1037, 128, %s8, [#allocation4]
    $region57: #{tpu_custom_call.1} parent=1 // pred_fallthru
      _
    // Predicated region
    $region58: #{tpu_custom_call.1} parent=1 // pred_check
      _
    $region59: #{tpu_custom_call.1} parent=1 // pred_check_branch
      %1041 = sbr.rel (0) target = $region61
    $region60: #{tpu_custom_call.1} parent=1 // pred_region
      %1042 = dma.done [#allocation4], 128
    $region61: #{tpu_custom_call.1} parent=1 // pred_fallthru
      _
    %1043 = vsyncpa [#allocation3], 1
    %1044 = vsyncpa [#allocation6], 1
    %1045 = vsyncpa [#allocation9], 1
    %1046 = vsyncpa [#allocation4], 1

</llo_original>
